<compile_context>
chip_gen: v5e
topology: v5e:2x2
jax: 0.10.0
libtpu: 0.0.40
codegen_flags: <defaults>
</compile_context>

<pallas_src>
import jax
import jax.numpy as jnp
from jax.experimental import pallas as pl
from jax.experimental.pallas import tpu as pltpu


# ---------------------------------------------------------------------------
# Pallas kernel: one row-tile of  (M, K) @ (K, N)  with f32 accumulation
# ---------------------------------------------------------------------------
def _matmul_kernel(x_ref, w_ref, o_ref):
    o_ref[...] = jnp.dot(
        x_ref[...], w_ref[...], preferred_element_type=jnp.float32
    ).astype(o_ref.dtype)


def _round_up(x, m):
    return ((x + m - 1) // m) * m


def _vmem_capacity_bytes():
    try:
        return int(pltpu.get_tpu_info().vmem_capacity_bytes)
    except Exception:
        return 64 * 1024 * 1024  # conservative default = v7x per-TensorCore VMEM


def _num_tensorcores():
    """Best-effort TensorCore-per-chip query (v7x: 2, v5e/v6e: 1)."""
    try:
        info = pltpu.get_tpu_info()
        for attr in ("num_cores", "core_count", "num_tensorcores", "tensorcore_count"):
            v = getattr(info, attr, None)
            if v:
                return int(v)
    except Exception:
        pass
    try:
        v = getattr(jax.devices()[0], "num_cores", None)
        if v:
            return int(v)
    except Exception:
        pass
    return 1  # conservative: never shrink tiles for cores we can't confirm exist


def _pack_factor(K, Nout):
    """Rows folded per packed row so BOTH the x tile (g*K lanes) and the output tile
    (g*Nout lanes) are lane-dense, keeping g*K <= 128 (one MXU pass on v5e) when the
    output is already dense."""
    g = 1
    if K < 128:
        g = max(g, 128 // K)                    # input-side lane density
    if Nout < 128:
        g = max(g, -(-128 // Nout))             # output-side lane density (vst not vst.msk)
    g_out_min = -(-128 // Nout) if Nout < 128 else 1
    while g > g_out_min and g * K > 128:        # don't exceed one 128-wide MXU pass
        g -= 1
    return max(g, 1)


def _packed_weight_bytes(cin, nout, itemsize):
    g = _pack_factor(cin, nout)
    return (g * cin) * (g * nout) * itemsize    # kron block-diagonal is g^2 * K * N dense


def _compose_chain(params, compute_dtype, max_weight_bytes):
    """Compose consecutive ConvTranspose3d(k=2,s=2) weights into as few segments as
    possible.  Each segment is (cin_s, Ks, cout_s) f32 with Ks = 8^(#layers in it) and
    column order (k_first..k_last, c); its (lane-packed) VMEM weight stays under
    max_weight_bytes.  Ideally this is ONE segment = one matmul for the whole chain."""
    itemsize = jnp.dtype(compute_dtype).itemsize
    segments = []
    cur = None
    for w in params:
        cin_l, cout_l = int(w.shape[0]), int(w.shape[1])
        # (Cin, Cout, kd, kh, kw) -> (Cin, 8, Cout)
        w3 = jnp.transpose(w, (0, 2, 3, 4, 1)).reshape(cin_l, 8, cout_l).astype(jnp.float32)
        if cur is None:
            cur = w3
            continue
        cin0, kacc, _ = cur.shape
        if _packed_weight_bytes(cin0, kacc * 8 * cout_l, itemsize) > max_weight_bytes:
            segments.append(cur)
            cur = w3
        else:
            cur = jnp.einsum("akc,cjd->akjd", cur, w3).reshape(cin0, kacc * 8, cout_l)
    segments.append(cur)
    return segments


def _choose_tile_and_vmem(Mp, Kp, Np, in_bytes, out_bytes, w_bufs, vmem_cap, n_cores):
    """Row-tile size against the queried per-generation VMEM capacity."""
    vmem_limit = (vmem_cap * 3) // 4          # ~96 MiB on v5e/v6e (128 MiB), ~48 MiB on v7x
    budget = int(vmem_limit * 0.85)

    def footprint(tm):
        return (2 * tm * Kp * in_bytes        # x row tile, double buffered
                + w_bufs * Kp * Np * in_bytes  # resident weight (1 or 2 buffers)
                + 2 * tm * Np * out_bytes      # output tile, double buffered
                + tm * Np * 4)                 # f32 matmul result before cast

    tm = 8192                                  # large tiles amortize ~0.35 us/grid step
    while tm > 8 and footprint(tm) > budget:
        tm //= 2
    tm = min(tm, Mp)                           # Mp is already sublane-aligned
    if n_cores > 1:
        # Multi-TensorCore parts only (v7x): keep enough grid steps so the "parallel"
        # row axis can shard across cores.  Never shrink on 1-TC v5e/v6e.
        while tm >= 1024 and pl.cdiv(Mp, tm) < 4 * n_cores:
            tm = _round_up(tm // 2, 16)
    vmem_limit = int(max(vmem_limit, min(footprint(tm) + (4 << 20), vmem_cap)))
    return tm, vmem_limit


def _tconv_matmul(x2d, w2d, *, vmem_cap, n_cores):
    """(M, K) @ (K, Nout) on the MXU, tiled over rows of x2d (single HBM pass).

    Lane-density packing: fold g consecutive rows into one packed row against a
    block-diagonal weight so both loads and stores use full 128-lane vregs; rows are
    zero-padded up to a multiple of g*sublane (never falls back to masked stores)."""
    M, K = x2d.shape
    Kw, Nout = w2d.shape
    assert K == Kw
    in_bytes = x2d.dtype.itemsize
    sub = 16 if in_bytes == 2 else 8           # bf16 sublane tile is 16

    g = _pack_factor(K, Nout)

    m_pad = _round_up(M, g * sub)
    if m_pad != M:
        x2d = jnp.pad(x2d, ((0, m_pad - M), (0, 0)))       # at most g*sub-1 tiny rows
    if g > 1:
        x2d = x2d.reshape(m_pad // g, g * K)                # free row-major reshape
        w2d = jnp.kron(jnp.eye(g, dtype=w2d.dtype), w2d)    # block-diagonal weight

    Mp, Kp = x2d.shape
    Np = w2d.shape[1]

    w_bytes = Kp * Np * in_bytes
    w_bufs = 1 if w_bytes > (4 << 20) else 2
    tm, vmem_limit = _choose_tile_and_vmem(
        Mp, Kp, Np, in_bytes, in_bytes, w_bufs, vmem_cap, n_cores)

    w_spec_kwargs = {}
    if w_bufs == 1:
        # Constant-index resident weight: single-buffer it so a multi-MiB composed /
        # kron-expanded weight isn't double-buffered (v5e VMEM, deep chains).
        w_spec_kwargs["pipeline_mode"] = pl.Buffered(1)

    out = pl.pallas_call(
        _matmul_kernel,
        out_shape=jax.ShapeDtypeStruct((Mp, Np), x2d.dtype),
        grid=(pl.cdiv(Mp, tm),),
        in_specs=[
            pl.BlockSpec((tm, Kp), lambda i: (i, 0)),               # row tile of x
            pl.BlockSpec((Kp, Np), lambda i: (0, 0), **w_spec_kwargs),  # resident weight
        ],
        out_specs=pl.BlockSpec((tm, Np), lambda i: (i, 0)),
        compiler_params=pltpu.CompilerParams(
            dimension_semantics=("parallel",),
            vmem_limit_bytes=vmem_limit,
        ),
    )(x2d, w2d)

    out = out.reshape(m_pad, Nout)             # free reshape back to (rows, Nout)
    if m_pad != M:
        out = out[:M]
    return out


# ---------------------------------------------------------------------------
# BlueBlock forward: chain of ConvTranspose3d(k=2, s=2, p=0, bias=False)
# ---------------------------------------------------------------------------
def blue_block_forward(x, params, *, compute_dtype=jnp.bfloat16,
                       channels_last=False, output_dtype=None):
    """x: (N, Cin, D, H, W) NCDHW; params[l]: PyTorch-layout (Cin_l, Cout_l, 2, 2, 2).

    Default output matches BlueBlock (conv_block=False): NCDHW, input dtype,
    (N, Cout_last, D*2^L, H*2^L, W*2^L).  Callers that can consume channels-last
    and/or bf16 should pass channels_last=True / output_dtype=jnp.bfloat16 — the final
    depth-to-space transpose + f32 upcast otherwise moves ~3x the HBM bytes of the
    matmul itself.
    """
    # TODO(synk): conv_block=True path (Conv3DBlock: Conv3d + BatchNorm3d + skip +
    # LeakyReLU) is not part of the default BlueBlock forward and is not implemented.
    N, Cin, D, H, W = x.shape
    L = len(params)
    out_dtype = x.dtype if output_dtype is None else jnp.dtype(output_dtype)
    cdt = jnp.dtype(compute_dtype) if compute_dtype is not None else jnp.dtype(x.dtype)

    vmem_cap = _vmem_capacity_bytes()
    n_cores = _num_tensorcores()

    # NCDHW -> rows ordered (n, d, h, w), channels last.  One boundary copy.
    a = jnp.transpose(x, (0, 2, 3, 4, 1)).reshape(N * D * H * W, Cin).astype(cdt)

    # Compose the whole transpose-conv chain into as few matmuls as VMEM allows
    # (ideally ONE): kills intermediate-activation HBM round trips entirely.
    max_w_bytes = max(2 << 20, vmem_cap // 8)
    segments = _compose_chain(params, cdt, max_w_bytes)

    c_last = Cin
    for seg in segments:
        cin_s, ks, cout_s = seg.shape
        w2d = seg.reshape(cin_s, ks * cout_s).astype(cdt)
        y = _tconv_matmul(a, w2d, vmem_cap=vmem_cap, n_cores=n_cores)  # (M, ks*cout)
        a = y.reshape(y.shape[0] * ks, cout_s)   # free: rows gain this segment's k factors
        c_last = cout_s

    # Deferred depth-to-space for ALL layers + layout/dtype conversion, folded into a
    # single XLA transpose (one HBM pass).
    view = a.reshape((N, D, H, W) + (2,) * (3 * L) + (c_last,))
    if channels_last:
        perm = ([0, 1] + [4 + 3 * l for l in range(L)]
                + [2] + [4 + 3 * l + 1 for l in range(L)]
                + [3] + [4 + 3 * l + 2 for l in range(L)]
                + [4 + 3 * L])
        out = jnp.transpose(view, perm).reshape(
            N, D * (2 ** L), H * (2 ** L), W * (2 ** L), c_last)
    else:
        perm = ([0, 4 + 3 * L, 1] + [4 + 3 * l for l in range(L)]
                + [2] + [4 + 3 * l + 1 for l in range(L)]
                + [3] + [4 + 3 * l + 2 for l in range(L)])
        out = jnp.transpose(view, perm).reshape(
            N, c_last, D * (2 ** L), H * (2 ** L), W * (2 ** L))
    return out.astype(out_dtype)


def init_blue_block_params(key, in_planes, out_planes, layers=1):
    """Deterministic ConvTranspose3d weights, PyTorch layout (Cin, Cout, 2, 2, 2)."""
    params = []
    cin = in_planes
    for _ in range(max(int(layers), 1)):
        key, sub = jax.random.split(key)
        fan = cin * 2 * 2 * 2
        bound = 1.0 / (fan ** 0.5)
        w = jax.random.uniform(sub, (cin, out_planes, 2, 2, 2), jnp.float32, -bound, bound)
        params.append(w)
        cin = out_planes
    return params


# Pure-JAX f32 reference (per-layer matmul + depth-to-space; independent of composition).
def _reference_forward(x, params):
    for w in params:
        N, Cin, D, H, W = x.shape
        Cout = w.shape[1]
        xf = jnp.transpose(x, (0, 2, 3, 4, 1)).reshape(-1, Cin)
        w2d = jnp.transpose(w, (0, 2, 3, 4, 1)).reshape(Cin, 8 * Cout)
        y = jnp.dot(xf, w2d, preferred_element_type=jnp.float32)
        y = y.reshape(N, D, H, W, 2, 2, 2, Cout)
        y = jnp.transpose(y, (0, 1, 4, 2, 5, 3, 6, 7)).reshape(N, 2 * D, 2 * H, 2 * W, Cout)
        x = jnp.transpose(y, (0, 4, 1, 2, 3))
    return x


if __name__ == "__main__":
    key = jax.random.PRNGKey(0)
    k_x, k_w, k_xi, k_wi = jax.random.split(key, 4)

    # Small shapes: batch=2, in_planes=8, out_planes=4, spatial (D, H, W) = (4, 8, 8).
    N, Cin, Cout = 2, 8, 4
    D, H, W = 4, 8, 8
    x = jax.random.normal(k_x, (N, Cin, D, H, W), jnp.float32)
    params2 = init_blue_block_params(k_w, Cin, Cout, layers=2)

    fwd_bf16 = jax.jit(lambda xx, pp: blue_block_forward(xx, pp, compute_dtype=jnp.bfloat16))
    fwd_f32 = jax.jit(lambda xx, pp: blue_block_forward(xx, pp, compute_dtype=None))
    fwd_ndhwc = jax.jit(lambda xx, pp: blue_block_forward(
        xx, pp, compute_dtype=jnp.bfloat16, channels_last=True, output_dtype=jnp.bfloat16))

    # Main run: default bf16 path, 2 chained transpose convs composed into one matmul.
    out = jax.block_until_ready(fwd_bf16(x, params2))
    assert out.shape == (N, Cout, 4 * D, 4 * H, 4 * W), out.shape
    assert out.dtype == x.dtype

    # Structural exactness with small-integer data (exact in bf16 and f32).
    x_int = jax.random.randint(k_xi, (N, Cin, D, H, W), -1, 2).astype(jnp.float32)
    params_int = [jax.random.randint(k_wi, p.shape, -1, 2).astype(jnp.float32) for p in params2]
    for prm in ([params_int[0]], params_int):            # layers = 1 and 2
        ref_i = _reference_forward(x_int, prm)
        for fwd in (fwd_bf16, fwd_f32):
            got_i = jax.block_until_ready(fwd(x_int, prm))
            assert got_i.shape == ref_i.shape
            assert jnp.allclose(got_i, ref_i, atol=1e-6), "structural mismatch"
    # channels-last / bf16 fast-output path.
    got_cl = jax.block_until_ready(fwd_ndhwc(x_int, params_int))
    ref_cl = jnp.transpose(_reference_forward(x_int, params_int), (0, 2, 3, 4, 1))
    assert got_cl.shape == ref_cl.shape
    assert jnp.allclose(got_cl.astype(jnp.float32), ref_cl, atol=1e-6), "NDHWC mismatch"

    # Numerical sanity of the default bf16 path against the f32 reference.
    ref = _reference_forward(x, params2)
    assert jnp.allclose(out, ref, atol=1e-2, rtol=5e-2), "bf16 mismatch vs f32 reference"

    print("KERNEL_OK")
</pallas_src>

<mosaic_0001>
module attributes {stable_mosaic.version = 11 : i64} {
  func.func @_matmul_kernel(%arg0: i32, %arg1: memref<32x128xbf16, #tpu.memory_space<vmem>>, %arg2: memref<128x4096xbf16, #tpu.memory_space<vmem>>, %arg3: memref<32x4096xbf16, #tpu.memory_space<vmem>>) attributes {dimension_semantics = [#tpu.dimension_semantics<parallel>], iteration_bounds = array<i64: 1>, scalar_prefetch = 0 : i64, scratch_operands = 0 : i64, tpu.core_type = #tpu.core_type<tc>, window_params = [{transform_indices = @transform_0, window_bounds = array<i64: 32, 128>}, {pipeline_mode = #tpu.pipeline_mode<synchronous>, transform_indices = @transform_1, window_bounds = array<i64: 128, 4096>}, {transform_indices = @transform_2, window_bounds = array<i64: 32, 4096>}]} {
    %c0 = arith.constant 0 : index
    %c0_0 = arith.constant 0 : index
    %0 = vector.load %arg1[%c0, %c0_0] : memref<32x128xbf16, #tpu.memory_space<vmem>>, vector<32x128xbf16>
    %c0_1 = arith.constant 0 : index
    %c0_2 = arith.constant 0 : index
    %1 = vector.load %arg2[%c0_1, %c0_2] : memref<128x4096xbf16, #tpu.memory_space<vmem>>, vector<128x4096xbf16>
    %cst = arith.constant dense<0.000000e+00> : vector<32x4096xf32>
    %2 = tpu.matmul %0, %1, %cst {dimension_numbers = #tpu.dot_dimension_numbers<[1], [0], [0], [1], [0, 0, 1, 1], [], []>} : vector<32x128xbf16>, vector<128x4096xbf16>, vector<32x4096xf32> -> vector<32x4096xf32>
    %3 = arith.truncf %2 : vector<32x4096xf32> to vector<32x4096xbf16>
    %c0_3 = arith.constant 0 : index
    %c0_4 = arith.constant 0 : index
    %4 = vector.load %arg3[%c0_3, %c0_4] : memref<32x4096xbf16, #tpu.memory_space<vmem>>, vector<32x4096xbf16>
    tpu.vector_store %arg3[%c0_3, %c0_4], %3 {strides = array<i32>} : memref<32x4096xbf16, #tpu.memory_space<vmem>>, vector<32x4096xbf16>,
    return
  }
  func.func @transform_0(%arg0: i32) -> (i32, i32) {
    %c0_i32 = arith.constant 0 : i32
    %c0_i32_0 = arith.constant 0 : i32
    return %arg0, %c0_i32 : i32, i32
  }
  func.func @transform_1(%arg0: i32) -> (i32, i32) {
    %c0_i32 = arith.constant 0 : i32
    %c0_i32_0 = arith.constant 0 : i32
    %c0_i32_1 = arith.constant 0 : i32
    return %c0_i32, %c0_i32_0 : i32, i32
  }
  func.func @transform_2(%arg0: i32) -> (i32, i32) {
    %c0_i32 = arith.constant 0 : i32
    %c0_i32_0 = arith.constant 0 : i32
    return %arg0, %c0_i32 : i32, i32
  }
}

</mosaic_0001>

<llo_original>
// kernel: _lambda_.1
$region0: #{_lambda_.1}
  #allocation0 [shape = 'u32[]', space=smem, size = 0x4, offset = 0x4, fixed_abs, tag = 'smem constant byte address 0x4 - core index']
  #allocation1 [shape = 'u32[72,128]{1,0:T(1,128)}', space=vmem, size = 0x9000, scoped, tag = 'internal scratch']
  %s0 = inlined_call_operand.vmem [shape: bf16[32,128], index: 0, kind: input, shape index: {}]
  %s1 = inlined_call_operand.vmem [shape: bf16[128,4096], index: 1, kind: input, shape index: {}]
  %s2 = inlined_call_operand.vmem [shape: bf16[32,4096], index: 2, kind: output, shape index: {}]
  %s3 = sld [smem:[#allocation0]]
  $region18: #{_lambda_.1} parent=0
    _
  %s5 = ssub.s32 1, %s3
  %s6 = scalar_select 0, %s5, %s3
  // Predicated region
  $region2: #{_lambda_.1} parent=0 // pred_check
    _
  $region3: #{_lambda_.1} parent=0 // pred_check_branch
    %8 = sbr.rel (0) target = $region5
  $region4: #{_lambda_.1} parent=0 // pred_region
    _
  $region5: #{_lambda_.1} parent=0 // pred_fallthru
    _
  // Predicated region
  $region6: #{_lambda_.1} parent=0 // pred_check
    _
  $region7: #{_lambda_.1} parent=0 // pred_check_branch
    %10 = sbr.rel (0) target = $region9
  $region8: #{_lambda_.1} parent=0 // pred_region
    _
  $region9: #{_lambda_.1} parent=0 // pred_fallthru
    _
  %v11 = vld [vmem:[%s0] sm:$0xf]
  %v12 = vld [vmem:[%s0 + $0x4] sm:$0xf]
  %v13 = vld [vmem:[%s0 + $0x8] sm:$0xf]
  %v14 = vld [vmem:[%s0 + $0xc] sm:$0xf]
  %v15 = vld [vmem:[%s1] sm:$0xff]
  %v16 = vld [vmem:[%s1 + $0x8] sm:$0xff]
  %v17 = vld [vmem:[%s1 + $0x10] sm:$0xff]
  %v18 = vld [vmem:[%s1 + $0x18] sm:$0xff]
  %v19 = vld [vmem:[%s1 + $0x20] sm:$0xff]
  %v20 = vld [vmem:[%s1 + $0x28] sm:$0xff]
  %v21 = vld [vmem:[%s1 + $0x30] sm:$0xff]
  %v22 = vld [vmem:[%s1 + $0x38] sm:$0xff]
  %v23 = vld [vmem:[%s1 + $0x40] sm:$0xff]
  %v24 = vld [vmem:[%s1 + $0x48] sm:$0xff]
  %v25 = vld [vmem:[%s1 + $0x50] sm:$0xff]
  %v26 = vld [vmem:[%s1 + $0x58] sm:$0xff]
  %v27 = vld [vmem:[%s1 + $0x60] sm:$0xff]
  %v28 = vld [vmem:[%s1 + $0x68] sm:$0xff]
  %v29 = vld [vmem:[%s1 + $0x70] sm:$0xff]
  %v30 = vld [vmem:[%s1 + $0x78] sm:$0xff]
  %v31 = vld [vmem:[%s1 + $0x80] sm:$0xff]
  %v32 = vld [vmem:[%s1 + $0x88] sm:$0xff]
  %v33 = vld [vmem:[%s1 + $0x90] sm:$0xff]
  %v34 = vld [vmem:[%s1 + $0x98] sm:$0xff]
  %v35 = vld [vmem:[%s1 + $0xa0] sm:$0xff]
  %v36 = vld [vmem:[%s1 + $0xa8] sm:$0xff]
  %v37 = vld [vmem:[%s1 + $0xb0] sm:$0xff]
  %v38 = vld [vmem:[%s1 + $0xb8] sm:$0xff]
  %v39 = vld [vmem:[%s1 + $0xc0] sm:$0xff]
  %v40 = vld [vmem:[%s1 + $0xc8] sm:$0xff]
  %v41 = vld [vmem:[%s1 + $0xd0] sm:$0xff]
  %v42 = vld [vmem:[%s1 + $0xd8] sm:$0xff]
  %v43 = vld [vmem:[%s1 + $0xe0] sm:$0xff]
  %v44 = vld [vmem:[%s1 + $0xe8] sm:$0xff]
  %v45 = vld [vmem:[%s1 + $0xf0] sm:$0xff]
  %v46 = vld [vmem:[%s1 + $0xf8] sm:$0xff]
  %v47 = vld [vmem:[%s1 + $0x100] sm:$0xff]
  %v48 = vld [vmem:[%s1 + $0x108] sm:$0xff]
  %v49 = vld [vmem:[%s1 + $0x110] sm:$0xff]
  %v50 = vld [vmem:[%s1 + $0x118] sm:$0xff]
  %v51 = vld [vmem:[%s1 + $0x120] sm:$0xff]
  %v52 = vld [vmem:[%s1 + $0x128] sm:$0xff]
  %v53 = vld [vmem:[%s1 + $0x130] sm:$0xff]
  %v54 = vld [vmem:[%s1 + $0x138] sm:$0xff]
  %v55 = vld [vmem:[%s1 + $0x140] sm:$0xff]
  %v56 = vld [vmem:[%s1 + $0x148] sm:$0xff]
  %v57 = vld [vmem:[%s1 + $0x150] sm:$0xff]
  %v58 = vld [vmem:[%s1 + $0x158] sm:$0xff]
  %v59 = vld [vmem:[%s1 + $0x160] sm:$0xff]
  %v60 = vld [vmem:[%s1 + $0x168] sm:$0xff]
  %v61 = vld [vmem:[%s1 + $0x170] sm:$0xff]
  %v62 = vld [vmem:[%s1 + $0x178] sm:$0xff]
  %v63 = vld [vmem:[%s1 + $0x180] sm:$0xff]
  %v64 = vld [vmem:[%s1 + $0x188] sm:$0xff]
  %v65 = vld [vmem:[%s1 + $0x190] sm:$0xff]
  %v66 = vld [vmem:[%s1 + $0x198] sm:$0xff]
  %v67 = vld [vmem:[%s1 + $0x1a0] sm:$0xff]
  %v68 = vld [vmem:[%s1 + $0x1a8] sm:$0xff]
  %v69 = vld [vmem:[%s1 + $0x1b0] sm:$0xff]
  %v70 = vld [vmem:[%s1 + $0x1b8] sm:$0xff]
  %v71 = vld [vmem:[%s1 + $0x1c0] sm:$0xff]
  %v72 = vld [vmem:[%s1 + $0x1c8] sm:$0xff]
  %v73 = vld [vmem:[%s1 + $0x1d0] sm:$0xff]
  %v74 = vld [vmem:[%s1 + $0x1d8] sm:$0xff]
  %v75 = vld [vmem:[%s1 + $0x1e0] sm:$0xff]
  %v76 = vld [vmem:[%s1 + $0x1e8] sm:$0xff]
  %v77 = vld [vmem:[%s1 + $0x1f0] sm:$0xff]
  %v78 = vld [vmem:[%s1 + $0x1f8] sm:$0xff]
  %v79 = vld [vmem:[%s1 + $0x200] sm:$0xff]
  %v80 = vld [vmem:[%s1 + $0x208] sm:$0xff]
  %v81 = vld [vmem:[%s1 + $0x210] sm:$0xff]
  %v82 = vld [vmem:[%s1 + $0x218] sm:$0xff]
  %v83 = vld [vmem:[%s1 + $0x220] sm:$0xff]
  %v84 = vld [vmem:[%s1 + $0x228] sm:$0xff]
  %v85 = vld [vmem:[%s1 + $0x230] sm:$0xff]
  %v86 = vld [vmem:[%s1 + $0x238] sm:$0xff]
  %v87 = vld [vmem:[%s1 + $0x240] sm:$0xff]
  %v88 = vld [vmem:[%s1 + $0x248] sm:$0xff]
  %v89 = vld [vmem:[%s1 + $0x250] sm:$0xff]
  %v90 = vld [vmem:[%s1 + $0x258] sm:$0xff]
  %v91 = vld [vmem:[%s1 + $0x260] sm:$0xff]
  %v92 = vld [vmem:[%s1 + $0x268] sm:$0xff]
  %v93 = vld [vmem:[%s1 + $0x270] sm:$0xff]
  %v94 = vld [vmem:[%s1 + $0x278] sm:$0xff]
  %v95 = vld [vmem:[%s1 + $0x280] sm:$0xff]
  %v96 = vld [vmem:[%s1 + $0x288] sm:$0xff]
  %v97 = vld [vmem:[%s1 + $0x290] sm:$0xff]
  %v98 = vld [vmem:[%s1 + $0x298] sm:$0xff]
  %v99 = vld [vmem:[%s1 + $0x2a0] sm:$0xff]
  %v100 = vld [vmem:[%s1 + $0x2a8] sm:$0xff]
  %v101 = vld [vmem:[%s1 + $0x2b0] sm:$0xff]
  %v102 = vld [vmem:[%s1 + $0x2b8] sm:$0xff]
  %v103 = vld [vmem:[%s1 + $0x2c0] sm:$0xff]
  %v104 = vld [vmem:[%s1 + $0x2c8] sm:$0xff]
  %v105 = vld [vmem:[%s1 + $0x2d0] sm:$0xff]
  %v106 = vld [vmem:[%s1 + $0x2d8] sm:$0xff]
  %v107 = vld [vmem:[%s1 + $0x2e0] sm:$0xff]
  %v108 = vld [vmem:[%s1 + $0x2e8] sm:$0xff]
  %v109 = vld [vmem:[%s1 + $0x2f0] sm:$0xff]
  %v110 = vld [vmem:[%s1 + $0x2f8] sm:$0xff]
  %v111 = vld [vmem:[%s1 + $0x300] sm:$0xff]
  %v112 = vld [vmem:[%s1 + $0x308] sm:$0xff]
  %v113 = vld [vmem:[%s1 + $0x310] sm:$0xff]
  %v114 = vld [vmem:[%s1 + $0x318] sm:$0xff]
  %v115 = vld [vmem:[%s1 + $0x320] sm:$0xff]
  %v116 = vld [vmem:[%s1 + $0x328] sm:$0xff]
  %v117 = vld [vmem:[%s1 + $0x330] sm:$0xff]
  %v118 = vld [vmem:[%s1 + $0x338] sm:$0xff]
  %v119 = vld [vmem:[%s1 + $0x340] sm:$0xff]
  %v120 = vld [vmem:[%s1 + $0x348] sm:$0xff]
  %v121 = vld [vmem:[%s1 + $0x350] sm:$0xff]
  %v122 = vld [vmem:[%s1 + $0x358] sm:$0xff]
  %v123 = vld [vmem:[%s1 + $0x360] sm:$0xff]
  %v124 = vld [vmem:[%s1 + $0x368] sm:$0xff]
  %v125 = vld [vmem:[%s1 + $0x370] sm:$0xff]
  %v126 = vld [vmem:[%s1 + $0x378] sm:$0xff]
  %v127 = vld [vmem:[%s1 + $0x380] sm:$0xff]
  %v128 = vld [vmem:[%s1 + $0x388] sm:$0xff]
  %v129 = vld [vmem:[%s1 + $0x390] sm:$0xff]
  %v130 = vld [vmem:[%s1 + $0x398] sm:$0xff]
  %v131 = vld [vmem:[%s1 + $0x3a0] sm:$0xff]
  %v132 = vld [vmem:[%s1 + $0x3a8] sm:$0xff]
  %v133 = vld [vmem:[%s1 + $0x3b0] sm:$0xff]
  %v134 = vld [vmem:[%s1 + $0x3b8] sm:$0xff]
  %v135 = vld [vmem:[%s1 + $0x3c0] sm:$0xff]
  %v136 = vld [vmem:[%s1 + $0x3c8] sm:$0xff]
  %v137 = vld [vmem:[%s1 + $0x3d0] sm:$0xff]
  %v138 = vld [vmem:[%s1 + $0x3d8] sm:$0xff]
  %v139 = vld [vmem:[%s1 + $0x3e0] sm:$0xff]
  %v140 = vld [vmem:[%s1 + $0x3e8] sm:$0xff]
  %v141 = vld [vmem:[%s1 + $0x3f0] sm:$0xff]
  %v142 = vld [vmem:[%s1 + $0x3f8] sm:$0xff]
  %v143 = vld [vmem:[%s1 + $0x400] sm:$0xff]
  %v144 = vld [vmem:[%s1 + $0x408] sm:$0xff]
  %v145 = vld [vmem:[%s1 + $0x410] sm:$0xff]
  %v146 = vld [vmem:[%s1 + $0x418] sm:$0xff]
  %v147 = vld [vmem:[%s1 + $0x420] sm:$0xff]
  %v148 = vld [vmem:[%s1 + $0x428] sm:$0xff]
  %v149 = vld [vmem:[%s1 + $0x430] sm:$0xff]
  %v150 = vld [vmem:[%s1 + $0x438] sm:$0xff]
  %v151 = vld [vmem:[%s1 + $0x440] sm:$0xff]
  %v152 = vld [vmem:[%s1 + $0x448] sm:$0xff]
  %v153 = vld [vmem:[%s1 + $0x450] sm:$0xff]
  %v154 = vld [vmem:[%s1 + $0x458] sm:$0xff]
  %v155 = vld [vmem:[%s1 + $0x460] sm:$0xff]
  %v156 = vld [vmem:[%s1 + $0x468] sm:$0xff]
  %v157 = vld [vmem:[%s1 + $0x470] sm:$0xff]
  %v158 = vld [vmem:[%s1 + $0x478] sm:$0xff]
  %v159 = vld [vmem:[%s1 + $0x480] sm:$0xff]
  %v160 = vld [vmem:[%s1 + $0x488] sm:$0xff]
  %v161 = vld [vmem:[%s1 + $0x490] sm:$0xff]
  %v162 = vld [vmem:[%s1 + $0x498] sm:$0xff]
  %v163 = vld [vmem:[%s1 + $0x4a0] sm:$0xff]
  %v164 = vld [vmem:[%s1 + $0x4a8] sm:$0xff]
  %v165 = vld [vmem:[%s1 + $0x4b0] sm:$0xff]
  %v166 = vld [vmem:[%s1 + $0x4b8] sm:$0xff]
  %v167 = vld [vmem:[%s1 + $0x4c0] sm:$0xff]
  %v168 = vld [vmem:[%s1 + $0x4c8] sm:$0xff]
  %v169 = vld [vmem:[%s1 + $0x4d0] sm:$0xff]
  %v170 = vld [vmem:[%s1 + $0x4d8] sm:$0xff]
  %v171 = vld [vmem:[%s1 + $0x4e0] sm:$0xff]
  %v172 = vld [vmem:[%s1 + $0x4e8] sm:$0xff]
  %v173 = vld [vmem:[%s1 + $0x4f0] sm:$0xff]
  %v174 = vld [vmem:[%s1 + $0x4f8] sm:$0xff]
  %v175 = vld [vmem:[%s1 + $0x500] sm:$0xff]
  %v176 = vld [vmem:[%s1 + $0x508] sm:$0xff]
  %v177 = vld [vmem:[%s1 + $0x510] sm:$0xff]
  %v178 = vld [vmem:[%s1 + $0x518] sm:$0xff]
  %v179 = vld [vmem:[%s1 + $0x520] sm:$0xff]
  %v180 = vld [vmem:[%s1 + $0x528] sm:$0xff]
  %v181 = vld [vmem:[%s1 + $0x530] sm:$0xff]
  %v182 = vld [vmem:[%s1 + $0x538] sm:$0xff]
  %v183 = vld [vmem:[%s1 + $0x540] sm:$0xff]
  %v184 = vld [vmem:[%s1 + $0x548] sm:$0xff]
  %v185 = vld [vmem:[%s1 + $0x550] sm:$0xff]
  %v186 = vld [vmem:[%s1 + $0x558] sm:$0xff]
  %v187 = vld [vmem:[%s1 + $0x560] sm:$0xff]
  %v188 = vld [vmem:[%s1 + $0x568] sm:$0xff]
  %v189 = vld [vmem:[%s1 + $0x570] sm:$0xff]
  %v190 = vld [vmem:[%s1 + $0x578] sm:$0xff]
  %v191 = vld [vmem:[%s1 + $0x580] sm:$0xff]
  %v192 = vld [vmem:[%s1 + $0x588] sm:$0xff]
  %v193 = vld [vmem:[%s1 + $0x590] sm:$0xff]
  %v194 = vld [vmem:[%s1 + $0x598] sm:$0xff]
  %v195 = vld [vmem:[%s1 + $0x5a0] sm:$0xff]
  %v196 = vld [vmem:[%s1 + $0x5a8] sm:$0xff]
  %v197 = vld [vmem:[%s1 + $0x5b0] sm:$0xff]
  %v198 = vld [vmem:[%s1 + $0x5b8] sm:$0xff]
  %v199 = vld [vmem:[%s1 + $0x5c0] sm:$0xff]
  %v200 = vld [vmem:[%s1 + $0x5c8] sm:$0xff]
  %v201 = vld [vmem:[%s1 + $0x5d0] sm:$0xff]
  %v202 = vld [vmem:[%s1 + $0x5d8] sm:$0xff]
  %v203 = vld [vmem:[%s1 + $0x5e0] sm:$0xff]
  %v204 = vld [vmem:[%s1 + $0x5e8] sm:$0xff]
  %v205 = vld [vmem:[%s1 + $0x5f0] sm:$0xff]
  %v206 = vld [vmem:[%s1 + $0x5f8] sm:$0xff]
  %v207 = vld [vmem:[%s1 + $0x600] sm:$0xff]
  %v208 = vld [vmem:[%s1 + $0x608] sm:$0xff]
  %v209 = vld [vmem:[%s1 + $0x610] sm:$0xff]
  %v210 = vld [vmem:[%s1 + $0x618] sm:$0xff]
  %v211 = vld [vmem:[%s1 + $0x620] sm:$0xff]
  %v212 = vld [vmem:[%s1 + $0x628] sm:$0xff]
  %v213 = vld [vmem:[%s1 + $0x630] sm:$0xff]
  %v214 = vld [vmem:[%s1 + $0x638] sm:$0xff]
  %v215 = vld [vmem:[%s1 + $0x640] sm:$0xff]
  %v216 = vld [vmem:[%s1 + $0x648] sm:$0xff]
  %v217 = vld [vmem:[%s1 + $0x650] sm:$0xff]
  %v218 = vld [vmem:[%s1 + $0x658] sm:$0xff]
  %v219 = vld [vmem:[%s1 + $0x660] sm:$0xff]
  %v220 = vld [vmem:[%s1 + $0x668] sm:$0xff]
  %v221 = vld [vmem:[%s1 + $0x670] sm:$0xff]
  %v222 = vld [vmem:[%s1 + $0x678] sm:$0xff]
  %v223 = vld [vmem:[%s1 + $0x680] sm:$0xff]
  %v224 = vld [vmem:[%s1 + $0x688] sm:$0xff]
  %v225 = vld [vmem:[%s1 + $0x690] sm:$0xff]
  %v226 = vld [vmem:[%s1 + $0x698] sm:$0xff]
  %v227 = vld [vmem:[%s1 + $0x6a0] sm:$0xff]
  %v228 = vld [vmem:[%s1 + $0x6a8] sm:$0xff]
  %v229 = vld [vmem:[%s1 + $0x6b0] sm:$0xff]
  %v230 = vld [vmem:[%s1 + $0x6b8] sm:$0xff]
  %v231 = vld [vmem:[%s1 + $0x6c0] sm:$0xff]
  %v232 = vld [vmem:[%s1 + $0x6c8] sm:$0xff]
  %v233 = vld [vmem:[%s1 + $0x6d0] sm:$0xff]
  %v234 = vld [vmem:[%s1 + $0x6d8] sm:$0xff]
  %v235 = vld [vmem:[%s1 + $0x6e0] sm:$0xff]
  %v236 = vld [vmem:[%s1 + $0x6e8] sm:$0xff]
  %v237 = vld [vmem:[%s1 + $0x6f0] sm:$0xff]
  %v238 = vld [vmem:[%s1 + $0x6f8] sm:$0xff]
  %v239 = vld [vmem:[%s1 + $0x700] sm:$0xff]
  %v240 = vld [vmem:[%s1 + $0x708] sm:$0xff]
  %v241 = vld [vmem:[%s1 + $0x710] sm:$0xff]
  %v242 = vld [vmem:[%s1 + $0x718] sm:$0xff]
  %v243 = vld [vmem:[%s1 + $0x720] sm:$0xff]
  %v244 = vld [vmem:[%s1 + $0x728] sm:$0xff]
  %v245 = vld [vmem:[%s1 + $0x730] sm:$0xff]
  %v246 = vld [vmem:[%s1 + $0x738] sm:$0xff]
  %v247 = vld [vmem:[%s1 + $0x740] sm:$0xff]
  %v248 = vld [vmem:[%s1 + $0x748] sm:$0xff]
  %v249 = vld [vmem:[%s1 + $0x750] sm:$0xff]
  %v250 = vld [vmem:[%s1 + $0x758] sm:$0xff]
  %v251 = vld [vmem:[%s1 + $0x760] sm:$0xff]
  %v252 = vld [vmem:[%s1 + $0x768] sm:$0xff]
  %v253 = vld [vmem:[%s1 + $0x770] sm:$0xff]
  %v254 = vld [vmem:[%s1 + $0x778] sm:$0xff]
  %v255 = vld [vmem:[%s1 + $0x780] sm:$0xff]
  %v256 = vld [vmem:[%s1 + $0x788] sm:$0xff]
  %v257 = vld [vmem:[%s1 + $0x790] sm:$0xff]
  %v258 = vld [vmem:[%s1 + $0x798] sm:$0xff]
  %v259 = vld [vmem:[%s1 + $0x7a0] sm:$0xff]
  %v260 = vld [vmem:[%s1 + $0x7a8] sm:$0xff]
  %v261 = vld [vmem:[%s1 + $0x7b0] sm:$0xff]
  %v262 = vld [vmem:[%s1 + $0x7b8] sm:$0xff]
  %v263 = vld [vmem:[%s1 + $0x7c0] sm:$0xff]
  %v264 = vld [vmem:[%s1 + $0x7c8] sm:$0xff]
  %v265 = vld [vmem:[%s1 + $0x7d0] sm:$0xff]
  %v266 = vld [vmem:[%s1 + $0x7d8] sm:$0xff]
  %v267 = vld [vmem:[%s1 + $0x7e0] sm:$0xff]
  %v268 = vld [vmem:[%s1 + $0x7e8] sm:$0xff]
  %v269 = vld [vmem:[%s1 + $0x7f0] sm:$0xff]
  %v270 = vld [vmem:[%s1 + $0x7f8] sm:$0xff]
  %v275 = vunpack.c.l.b16 %v11
  %v276 = vunpack.c.l.b16 %v12
  %v277 = vunpack.c.l.b16 %v13
  %v278 = vunpack.c.l.b16 %v14
  %v279 = vpack.c.b16 %v276, %v275
  %v280 = vpack.c.b16 %v278, %v277
  %v539 = vunpack.c.l.b16 %v15
  %v540 = vunpack.c.h.b16 %v15
  %v541 = vunpack.c.l.b16 %v16
  %v542 = vunpack.c.h.b16 %v16
  %v543 = vunpack.c.l.b16 %v17
  %v544 = vunpack.c.h.b16 %v17
  %v545 = vunpack.c.l.b16 %v18
  %v546 = vunpack.c.h.b16 %v18
  %v547 = vunpack.c.l.b16 %v19
  %v548 = vunpack.c.h.b16 %v19
  %v549 = vunpack.c.l.b16 %v20
  %v550 = vunpack.c.h.b16 %v20
  %v551 = vunpack.c.l.b16 %v21
  %v552 = vunpack.c.h.b16 %v21
  %v553 = vunpack.c.l.b16 %v22
  %v554 = vunpack.c.h.b16 %v22
  %v555 = vunpack.c.l.b16 %v23
  %v556 = vunpack.c.h.b16 %v23
  %v557 = vunpack.c.l.b16 %v24
  %v558 = vunpack.c.h.b16 %v24
  %v559 = vunpack.c.l.b16 %v25
  %v560 = vunpack.c.h.b16 %v25
  %v561 = vunpack.c.l.b16 %v26
  %v562 = vunpack.c.h.b16 %v26
  %v563 = vunpack.c.l.b16 %v27
  %v564 = vunpack.c.h.b16 %v27
  %v565 = vunpack.c.l.b16 %v28
  %v566 = vunpack.c.h.b16 %v28
  %v567 = vunpack.c.l.b16 %v29
  %v568 = vunpack.c.h.b16 %v29
  %v569 = vunpack.c.l.b16 %v30
  %v570 = vunpack.c.h.b16 %v30
  %v571 = vunpack.c.l.b16 %v31
  %v572 = vunpack.c.h.b16 %v31
  %v573 = vunpack.c.l.b16 %v32
  %v574 = vunpack.c.h.b16 %v32
  %v575 = vunpack.c.l.b16 %v33
  %v576 = vunpack.c.h.b16 %v33
  %v577 = vunpack.c.l.b16 %v34
  %v578 = vunpack.c.h.b16 %v34
  %v579 = vunpack.c.l.b16 %v35
  %v580 = vunpack.c.h.b16 %v35
  %v581 = vunpack.c.l.b16 %v36
  %v582 = vunpack.c.h.b16 %v36
  %v583 = vunpack.c.l.b16 %v37
  %v584 = vunpack.c.h.b16 %v37
  %v585 = vunpack.c.l.b16 %v38
  %v586 = vunpack.c.h.b16 %v38
  %v587 = vunpack.c.l.b16 %v39
  %v588 = vunpack.c.h.b16 %v39
  %v589 = vunpack.c.l.b16 %v40
  %v590 = vunpack.c.h.b16 %v40
  %v591 = vunpack.c.l.b16 %v41
  %v592 = vunpack.c.h.b16 %v41
  %v593 = vunpack.c.l.b16 %v42
  %v594 = vunpack.c.h.b16 %v42
  %v595 = vunpack.c.l.b16 %v43
  %v596 = vunpack.c.h.b16 %v43
  %v597 = vunpack.c.l.b16 %v44
  %v598 = vunpack.c.h.b16 %v44
  %v599 = vunpack.c.l.b16 %v45
  %v600 = vunpack.c.h.b16 %v45
  %v601 = vunpack.c.l.b16 %v46
  %v602 = vunpack.c.h.b16 %v46
  %v603 = vunpack.c.l.b16 %v47
  %v604 = vunpack.c.h.b16 %v47
  %v605 = vunpack.c.l.b16 %v48
  %v606 = vunpack.c.h.b16 %v48
  %v607 = vunpack.c.l.b16 %v49
  %v608 = vunpack.c.h.b16 %v49
  %v609 = vunpack.c.l.b16 %v50
  %v610 = vunpack.c.h.b16 %v50
  %v611 = vunpack.c.l.b16 %v51
  %v612 = vunpack.c.h.b16 %v51
  %v613 = vunpack.c.l.b16 %v52
  %v614 = vunpack.c.h.b16 %v52
  %v615 = vunpack.c.l.b16 %v53
  %v616 = vunpack.c.h.b16 %v53
  %v617 = vunpack.c.l.b16 %v54
  %v618 = vunpack.c.h.b16 %v54
  %v619 = vunpack.c.l.b16 %v55
  %v620 = vunpack.c.h.b16 %v55
  %v621 = vunpack.c.l.b16 %v56
  %v622 = vunpack.c.h.b16 %v56
  %v623 = vunpack.c.l.b16 %v57
  %v624 = vunpack.c.h.b16 %v57
  %v625 = vunpack.c.l.b16 %v58
  %v626 = vunpack.c.h.b16 %v58
  %v627 = vunpack.c.l.b16 %v59
  %v628 = vunpack.c.h.b16 %v59
  %v629 = vunpack.c.l.b16 %v60
  %v630 = vunpack.c.h.b16 %v60
  %v631 = vunpack.c.l.b16 %v61
  %v632 = vunpack.c.h.b16 %v61
  %v633 = vunpack.c.l.b16 %v62
  %v634 = vunpack.c.h.b16 %v62
  %v635 = vunpack.c.l.b16 %v63
  %v636 = vunpack.c.h.b16 %v63
  %v637 = vunpack.c.l.b16 %v64
  %v638 = vunpack.c.h.b16 %v64
  %v639 = vunpack.c.l.b16 %v65
  %v640 = vunpack.c.h.b16 %v65
  %v641 = vunpack.c.l.b16 %v66
  %v642 = vunpack.c.h.b16 %v66
  %v643 = vunpack.c.l.b16 %v67
  %v644 = vunpack.c.h.b16 %v67
  %v645 = vunpack.c.l.b16 %v68
  %v646 = vunpack.c.h.b16 %v68
  %v647 = vunpack.c.l.b16 %v69
  %v648 = vunpack.c.h.b16 %v69
  %v649 = vunpack.c.l.b16 %v70
  %v650 = vunpack.c.h.b16 %v70
  %v651 = vunpack.c.l.b16 %v71
  %v652 = vunpack.c.h.b16 %v71
  %v653 = vunpack.c.l.b16 %v72
  %v654 = vunpack.c.h.b16 %v72
  %v655 = vunpack.c.l.b16 %v73
  %v656 = vunpack.c.h.b16 %v73
  %v657 = vunpack.c.l.b16 %v74
  %v658 = vunpack.c.h.b16 %v74
  %v659 = vunpack.c.l.b16 %v75
  %v660 = vunpack.c.h.b16 %v75
  %v661 = vunpack.c.l.b16 %v76
  %v662 = vunpack.c.h.b16 %v76
  %v663 = vunpack.c.l.b16 %v77
  %v664 = vunpack.c.h.b16 %v77
  %v665 = vunpack.c.l.b16 %v78
  %v666 = vunpack.c.h.b16 %v78
  %v667 = vunpack.c.l.b16 %v79
  %v668 = vunpack.c.h.b16 %v79
  %v669 = vunpack.c.l.b16 %v80
  %v670 = vunpack.c.h.b16 %v80
  %v671 = vunpack.c.l.b16 %v81
  %v672 = vunpack.c.h.b16 %v81
  %v673 = vunpack.c.l.b16 %v82
  %v674 = vunpack.c.h.b16 %v82
  %v675 = vunpack.c.l.b16 %v83
  %v676 = vunpack.c.h.b16 %v83
  %v677 = vunpack.c.l.b16 %v84
  %v678 = vunpack.c.h.b16 %v84
  %v679 = vunpack.c.l.b16 %v85
  %v680 = vunpack.c.h.b16 %v85
  %v681 = vunpack.c.l.b16 %v86
  %v682 = vunpack.c.h.b16 %v86
  %v683 = vunpack.c.l.b16 %v87
  %v684 = vunpack.c.h.b16 %v87
  %v685 = vunpack.c.l.b16 %v88
  %v686 = vunpack.c.h.b16 %v88
  %v687 = vunpack.c.l.b16 %v89
  %v688 = vunpack.c.h.b16 %v89
  %v689 = vunpack.c.l.b16 %v90
  %v690 = vunpack.c.h.b16 %v90
  %v691 = vunpack.c.l.b16 %v91
  %v692 = vunpack.c.h.b16 %v91
  %v693 = vunpack.c.l.b16 %v92
  %v694 = vunpack.c.h.b16 %v92
  %v695 = vunpack.c.l.b16 %v93
  %v696 = vunpack.c.h.b16 %v93
  %v697 = vunpack.c.l.b16 %v94
  %v698 = vunpack.c.h.b16 %v94
  %v699 = vunpack.c.l.b16 %v95
  %v700 = vunpack.c.h.b16 %v95
  %v701 = vunpack.c.l.b16 %v96
  %v702 = vunpack.c.h.b16 %v96
  %v703 = vunpack.c.l.b16 %v97
  %v704 = vunpack.c.h.b16 %v97
  %v705 = vunpack.c.l.b16 %v98
  %v706 = vunpack.c.h.b16 %v98
  %v707 = vunpack.c.l.b16 %v99
  %v708 = vunpack.c.h.b16 %v99
  %v709 = vunpack.c.l.b16 %v100
  %v710 = vunpack.c.h.b16 %v100
  %v711 = vunpack.c.l.b16 %v101
  %v712 = vunpack.c.h.b16 %v101
  %v713 = vunpack.c.l.b16 %v102
  %v714 = vunpack.c.h.b16 %v102
  %v715 = vunpack.c.l.b16 %v103
  %v716 = vunpack.c.h.b16 %v103
  %v717 = vunpack.c.l.b16 %v104
  %v718 = vunpack.c.h.b16 %v104
  %v719 = vunpack.c.l.b16 %v105
  %v720 = vunpack.c.h.b16 %v105
  %v721 = vunpack.c.l.b16 %v106
  %v722 = vunpack.c.h.b16 %v106
  %v723 = vunpack.c.l.b16 %v107
  %v724 = vunpack.c.h.b16 %v107
  %v725 = vunpack.c.l.b16 %v108
  %v726 = vunpack.c.h.b16 %v108
  %v727 = vunpack.c.l.b16 %v109
  %v728 = vunpack.c.h.b16 %v109
  %v729 = vunpack.c.l.b16 %v110
  %v730 = vunpack.c.h.b16 %v110
  %v731 = vunpack.c.l.b16 %v111
  %v732 = vunpack.c.h.b16 %v111
  %v733 = vunpack.c.l.b16 %v112
  %v734 = vunpack.c.h.b16 %v112
  %v735 = vunpack.c.l.b16 %v113
  %v736 = vunpack.c.h.b16 %v113
  %v737 = vunpack.c.l.b16 %v114
  %v738 = vunpack.c.h.b16 %v114
  %v739 = vunpack.c.l.b16 %v115
  %v740 = vunpack.c.h.b16 %v115
  %v741 = vunpack.c.l.b16 %v116
  %v742 = vunpack.c.h.b16 %v116
  %v743 = vunpack.c.l.b16 %v117
  %v744 = vunpack.c.h.b16 %v117
  %v745 = vunpack.c.l.b16 %v118
  %v746 = vunpack.c.h.b16 %v118
  %v747 = vunpack.c.l.b16 %v119
  %v748 = vunpack.c.h.b16 %v119
  %v749 = vunpack.c.l.b16 %v120
  %v750 = vunpack.c.h.b16 %v120
  %v751 = vunpack.c.l.b16 %v121
  %v752 = vunpack.c.h.b16 %v121
  %v753 = vunpack.c.l.b16 %v122
  %v754 = vunpack.c.h.b16 %v122
  %v755 = vunpack.c.l.b16 %v123
  %v756 = vunpack.c.h.b16 %v123
  %v757 = vunpack.c.l.b16 %v124
  %v758 = vunpack.c.h.b16 %v124
  %v759 = vunpack.c.l.b16 %v125
  %v760 = vunpack.c.h.b16 %v125
  %v761 = vunpack.c.l.b16 %v126
  %v762 = vunpack.c.h.b16 %v126
  %v763 = vunpack.c.l.b16 %v127
  %v764 = vunpack.c.h.b16 %v127
  %v765 = vunpack.c.l.b16 %v128
  %v766 = vunpack.c.h.b16 %v128
  %v767 = vunpack.c.l.b16 %v129
  %v768 = vunpack.c.h.b16 %v129
  %v769 = vunpack.c.l.b16 %v130
  %v770 = vunpack.c.h.b16 %v130
  %v771 = vunpack.c.l.b16 %v131
  %v772 = vunpack.c.h.b16 %v131
  %v773 = vunpack.c.l.b16 %v132
  %v774 = vunpack.c.h.b16 %v132
  %v775 = vunpack.c.l.b16 %v133
  %v776 = vunpack.c.h.b16 %v133
  %v777 = vunpack.c.l.b16 %v134
  %v778 = vunpack.c.h.b16 %v134
  %v779 = vunpack.c.l.b16 %v135
  %v780 = vunpack.c.h.b16 %v135
  %v781 = vunpack.c.l.b16 %v136
  %v782 = vunpack.c.h.b16 %v136
  %v783 = vunpack.c.l.b16 %v137
  %v784 = vunpack.c.h.b16 %v137
  %v785 = vunpack.c.l.b16 %v138
  %v786 = vunpack.c.h.b16 %v138
  %v787 = vunpack.c.l.b16 %v139
  %v788 = vunpack.c.h.b16 %v139
  %v789 = vunpack.c.l.b16 %v140
  %v790 = vunpack.c.h.b16 %v140
  %v791 = vunpack.c.l.b16 %v141
  %v792 = vunpack.c.h.b16 %v141
  %v793 = vunpack.c.l.b16 %v142
  %v794 = vunpack.c.h.b16 %v142
  %v795 = vunpack.c.l.b16 %v143
  %v796 = vunpack.c.h.b16 %v143
  %v797 = vunpack.c.l.b16 %v144
  %v798 = vunpack.c.h.b16 %v144
  %v799 = vunpack.c.l.b16 %v145
  %v800 = vunpack.c.h.b16 %v145
  %v801 = vunpack.c.l.b16 %v146
  %v802 = vunpack.c.h.b16 %v146
  %v803 = vunpack.c.l.b16 %v147
  %v804 = vunpack.c.h.b16 %v147
  %v805 = vunpack.c.l.b16 %v148
  %v806 = vunpack.c.h.b16 %v148
  %v807 = vunpack.c.l.b16 %v149
  %v808 = vunpack.c.h.b16 %v149
  %v809 = vunpack.c.l.b16 %v150
  %v810 = vunpack.c.h.b16 %v150
  %v811 = vunpack.c.l.b16 %v151
  %v812 = vunpack.c.h.b16 %v151
  %v813 = vunpack.c.l.b16 %v152
  %v814 = vunpack.c.h.b16 %v152
  %v815 = vunpack.c.l.b16 %v153
  %v816 = vunpack.c.h.b16 %v153
  %v817 = vunpack.c.l.b16 %v154
  %v818 = vunpack.c.h.b16 %v154
  %v819 = vunpack.c.l.b16 %v155
  %v820 = vunpack.c.h.b16 %v155
  %v821 = vunpack.c.l.b16 %v156
  %v822 = vunpack.c.h.b16 %v156
  %v823 = vunpack.c.l.b16 %v157
  %v824 = vunpack.c.h.b16 %v157
  %v825 = vunpack.c.l.b16 %v158
  %v826 = vunpack.c.h.b16 %v158
  %v827 = vunpack.c.l.b16 %v159
  %v828 = vunpack.c.h.b16 %v159
  %v829 = vunpack.c.l.b16 %v160
  %v830 = vunpack.c.h.b16 %v160
  %v831 = vunpack.c.l.b16 %v161
  %v832 = vunpack.c.h.b16 %v161
  %v833 = vunpack.c.l.b16 %v162
  %v834 = vunpack.c.h.b16 %v162
  %v835 = vunpack.c.l.b16 %v163
  %v836 = vunpack.c.h.b16 %v163
  %v837 = vunpack.c.l.b16 %v164
  %v838 = vunpack.c.h.b16 %v164
  %v839 = vunpack.c.l.b16 %v165
  %v840 = vunpack.c.h.b16 %v165
  %v841 = vunpack.c.l.b16 %v166
  %v842 = vunpack.c.h.b16 %v166
  %v843 = vunpack.c.l.b16 %v167
  %v844 = vunpack.c.h.b16 %v167
  %v845 = vunpack.c.l.b16 %v168
  %v846 = vunpack.c.h.b16 %v168
  %v847 = vunpack.c.l.b16 %v169
  %v848 = vunpack.c.h.b16 %v169
  %v849 = vunpack.c.l.b16 %v170
  %v850 = vunpack.c.h.b16 %v170
  %v851 = vunpack.c.l.b16 %v171
  %v852 = vunpack.c.h.b16 %v171
  %v853 = vunpack.c.l.b16 %v172
  %v854 = vunpack.c.h.b16 %v172
  %v855 = vunpack.c.l.b16 %v173
  %v856 = vunpack.c.h.b16 %v173
  %v857 = vunpack.c.l.b16 %v174
  %v858 = vunpack.c.h.b16 %v174
  %v859 = vunpack.c.l.b16 %v175
  %v860 = vunpack.c.h.b16 %v175
  %v861 = vunpack.c.l.b16 %v176
  %v862 = vunpack.c.h.b16 %v176
  %v863 = vunpack.c.l.b16 %v177
  %v864 = vunpack.c.h.b16 %v177
  %v865 = vunpack.c.l.b16 %v178
  %v866 = vunpack.c.h.b16 %v178
  %v867 = vunpack.c.l.b16 %v179
  %v868 = vunpack.c.h.b16 %v179
  %v869 = vunpack.c.l.b16 %v180
  %v870 = vunpack.c.h.b16 %v180
  %v871 = vunpack.c.l.b16 %v181
  %v872 = vunpack.c.h.b16 %v181
  %v873 = vunpack.c.l.b16 %v182
  %v874 = vunpack.c.h.b16 %v182
  %v875 = vunpack.c.l.b16 %v183
  %v876 = vunpack.c.h.b16 %v183
  %v877 = vunpack.c.l.b16 %v184
  %v878 = vunpack.c.h.b16 %v184
  %v879 = vunpack.c.l.b16 %v185
  %v880 = vunpack.c.h.b16 %v185
  %v881 = vunpack.c.l.b16 %v186
  %v882 = vunpack.c.h.b16 %v186
  %v883 = vunpack.c.l.b16 %v187
  %v884 = vunpack.c.h.b16 %v187
  %v885 = vunpack.c.l.b16 %v188
  %v886 = vunpack.c.h.b16 %v188
  %v887 = vunpack.c.l.b16 %v189
  %v888 = vunpack.c.h.b16 %v189
  %v889 = vunpack.c.l.b16 %v190
  %v890 = vunpack.c.h.b16 %v190
  %v891 = vunpack.c.l.b16 %v191
  %v892 = vunpack.c.h.b16 %v191
  %v893 = vunpack.c.l.b16 %v192
  %v894 = vunpack.c.h.b16 %v192
  %v895 = vunpack.c.l.b16 %v193
  %v896 = vunpack.c.h.b16 %v193
  %v897 = vunpack.c.l.b16 %v194
  %v898 = vunpack.c.h.b16 %v194
  %v899 = vunpack.c.l.b16 %v195
  %v900 = vunpack.c.h.b16 %v195
  %v901 = vunpack.c.l.b16 %v196
  %v902 = vunpack.c.h.b16 %v196
  %v903 = vunpack.c.l.b16 %v197
  %v904 = vunpack.c.h.b16 %v197
  %v905 = vunpack.c.l.b16 %v198
  %v906 = vunpack.c.h.b16 %v198
  %v907 = vunpack.c.l.b16 %v199
  %v908 = vunpack.c.h.b16 %v199
  %v909 = vunpack.c.l.b16 %v200
  %v910 = vunpack.c.h.b16 %v200
  %v911 = vunpack.c.l.b16 %v201
  %v912 = vunpack.c.h.b16 %v201
  %v913 = vunpack.c.l.b16 %v202
  %v914 = vunpack.c.h.b16 %v202
  %v915 = vunpack.c.l.b16 %v203
  %v916 = vunpack.c.h.b16 %v203
  %v917 = vunpack.c.l.b16 %v204
  %v918 = vunpack.c.h.b16 %v204
  %v919 = vunpack.c.l.b16 %v205
  %v920 = vunpack.c.h.b16 %v205
  %v921 = vunpack.c.l.b16 %v206
  %v922 = vunpack.c.h.b16 %v206
  %v923 = vunpack.c.l.b16 %v207
  %v924 = vunpack.c.h.b16 %v207
  %v925 = vunpack.c.l.b16 %v208
  %v926 = vunpack.c.h.b16 %v208
  %v927 = vunpack.c.l.b16 %v209
  %v928 = vunpack.c.h.b16 %v209
  %v929 = vunpack.c.l.b16 %v210
  %v930 = vunpack.c.h.b16 %v210
  %v931 = vunpack.c.l.b16 %v211
  %v932 = vunpack.c.h.b16 %v211
  %v933 = vunpack.c.l.b16 %v212
  %v934 = vunpack.c.h.b16 %v212
  %v935 = vunpack.c.l.b16 %v213
  %v936 = vunpack.c.h.b16 %v213
  %v937 = vunpack.c.l.b16 %v214
  %v938 = vunpack.c.h.b16 %v214
  %v939 = vunpack.c.l.b16 %v215
  %v940 = vunpack.c.h.b16 %v215
  %v941 = vunpack.c.l.b16 %v216
  %v942 = vunpack.c.h.b16 %v216
  %v943 = vunpack.c.l.b16 %v217
  %v944 = vunpack.c.h.b16 %v217
  %v945 = vunpack.c.l.b16 %v218
  %v946 = vunpack.c.h.b16 %v218
  %v947 = vunpack.c.l.b16 %v219
  %v948 = vunpack.c.h.b16 %v219
  %v949 = vunpack.c.l.b16 %v220
  %v950 = vunpack.c.h.b16 %v220
  %v951 = vunpack.c.l.b16 %v221
  %v952 = vunpack.c.h.b16 %v221
  %v953 = vunpack.c.l.b16 %v222
  %v954 = vunpack.c.h.b16 %v222
  %v955 = vunpack.c.l.b16 %v223
  %v956 = vunpack.c.h.b16 %v223
  %v957 = vunpack.c.l.b16 %v224
  %v958 = vunpack.c.h.b16 %v224
  %v959 = vunpack.c.l.b16 %v225
  %v960 = vunpack.c.h.b16 %v225
  %v961 = vunpack.c.l.b16 %v226
  %v962 = vunpack.c.h.b16 %v226
  %v963 = vunpack.c.l.b16 %v227
  %v964 = vunpack.c.h.b16 %v227
  %v965 = vunpack.c.l.b16 %v228
  %v966 = vunpack.c.h.b16 %v228
  %v967 = vunpack.c.l.b16 %v229
  %v968 = vunpack.c.h.b16 %v229
  %v969 = vunpack.c.l.b16 %v230
  %v970 = vunpack.c.h.b16 %v230
  %v971 = vunpack.c.l.b16 %v231
  %v972 = vunpack.c.h.b16 %v231
  %v973 = vunpack.c.l.b16 %v232
  %v974 = vunpack.c.h.b16 %v232
  %v975 = vunpack.c.l.b16 %v233
  %v976 = vunpack.c.h.b16 %v233
  %v977 = vunpack.c.l.b16 %v234
  %v978 = vunpack.c.h.b16 %v234
  %v979 = vunpack.c.l.b16 %v235
  %v980 = vunpack.c.h.b16 %v235
  %v981 = vunpack.c.l.b16 %v236
  %v982 = vunpack.c.h.b16 %v236
  %v983 = vunpack.c.l.b16 %v237
  %v984 = vunpack.c.h.b16 %v237
  %v985 = vunpack.c.l.b16 %v238
  %v986 = vunpack.c.h.b16 %v238
  %v987 = vunpack.c.l.b16 %v239
  %v988 = vunpack.c.h.b16 %v239
  %v989 = vunpack.c.l.b16 %v240
  %v990 = vunpack.c.h.b16 %v240
  %v991 = vunpack.c.l.b16 %v241
  %v992 = vunpack.c.h.b16 %v241
  %v993 = vunpack.c.l.b16 %v242
  %v994 = vunpack.c.h.b16 %v242
  %v995 = vunpack.c.l.b16 %v243
  %v996 = vunpack.c.h.b16 %v243
  %v997 = vunpack.c.l.b16 %v244
  %v998 = vunpack.c.h.b16 %v244
  %v999 = vunpack.c.l.b16 %v245
  %v1000 = vunpack.c.h.b16 %v245
  %v1001 = vunpack.c.l.b16 %v246
  %v1002 = vunpack.c.h.b16 %v246
  %v1003 = vunpack.c.l.b16 %v247
  %v1004 = vunpack.c.h.b16 %v247
  %v1005 = vunpack.c.l.b16 %v248
  %v1006 = vunpack.c.h.b16 %v248
  %v1007 = vunpack.c.l.b16 %v249
  %v1008 = vunpack.c.h.b16 %v249
  %v1009 = vunpack.c.l.b16 %v250
  %v1010 = vunpack.c.h.b16 %v250
  %v1011 = vunpack.c.l.b16 %v251
  %v1012 = vunpack.c.h.b16 %v251
  %v1013 = vunpack.c.l.b16 %v252
  %v1014 = vunpack.c.h.b16 %v252
  %v1015 = vunpack.c.l.b16 %v253
  %v1016 = vunpack.c.h.b16 %v253
  %v1017 = vunpack.c.l.b16 %v254
  %v1018 = vunpack.c.h.b16 %v254
  %v1019 = vunpack.c.l.b16 %v255
  %v1020 = vunpack.c.h.b16 %v255
  %v1021 = vunpack.c.l.b16 %v256
  %v1022 = vunpack.c.h.b16 %v256
  %v1023 = vunpack.c.l.b16 %v257
  %v1024 = vunpack.c.h.b16 %v257
  %v1025 = vunpack.c.l.b16 %v258
  %v1026 = vunpack.c.h.b16 %v258
  %v1027 = vunpack.c.l.b16 %v259
  %v1028 = vunpack.c.h.b16 %v259
  %v1029 = vunpack.c.l.b16 %v260
  %v1030 = vunpack.c.h.b16 %v260
  %v1031 = vunpack.c.l.b16 %v261
  %v1032 = vunpack.c.h.b16 %v261
  %v1033 = vunpack.c.l.b16 %v262
  %v1034 = vunpack.c.h.b16 %v262
  %v1035 = vunpack.c.l.b16 %v263
  %v1036 = vunpack.c.h.b16 %v263
  %v1037 = vunpack.c.l.b16 %v264
  %v1038 = vunpack.c.h.b16 %v264
  %v1039 = vunpack.c.l.b16 %v265
  %v1040 = vunpack.c.h.b16 %v265
  %v1041 = vunpack.c.l.b16 %v266
  %v1042 = vunpack.c.h.b16 %v266
  %v1043 = vunpack.c.l.b16 %v267
  %v1044 = vunpack.c.h.b16 %v267
  %v1045 = vunpack.c.l.b16 %v268
  %v1046 = vunpack.c.h.b16 %v268
  %v1047 = vunpack.c.l.b16 %v269
  %v1048 = vunpack.c.h.b16 %v269
  %v1049 = vunpack.c.l.b16 %v270
  %v1050 = vunpack.c.h.b16 %v270
  %v1051 = vpack.c.b16 %v571, %v539
  %v1052 = vpack.c.b16 %v572, %v540
  %v1053 = vpack.c.b16 %v573, %v541
  %v1054 = vpack.c.b16 %v574, %v542
  %v1055 = vpack.c.b16 %v575, %v543
  %v1056 = vpack.c.b16 %v576, %v544
  %v1057 = vpack.c.b16 %v577, %v545
  %v1058 = vpack.c.b16 %v578, %v546
  %v1059 = vpack.c.b16 %v579, %v547
  %v1060 = vpack.c.b16 %v580, %v548
  %v1061 = vpack.c.b16 %v581, %v549
  %v1062 = vpack.c.b16 %v582, %v550
  %v1063 = vpack.c.b16 %v583, %v551
  %v1064 = vpack.c.b16 %v584, %v552
  %v1065 = vpack.c.b16 %v585, %v553
  %v1066 = vpack.c.b16 %v586, %v554
  %v1067 = vpack.c.b16 %v587, %v555
  %v1068 = vpack.c.b16 %v588, %v556
  %v1069 = vpack.c.b16 %v589, %v557
  %v1070 = vpack.c.b16 %v590, %v558
  %v1071 = vpack.c.b16 %v591, %v559
  %v1072 = vpack.c.b16 %v592, %v560
  %v1073 = vpack.c.b16 %v593, %v561
  %v1074 = vpack.c.b16 %v594, %v562
  %v1075 = vpack.c.b16 %v595, %v563
  %v1076 = vpack.c.b16 %v596, %v564
  %v1077 = vpack.c.b16 %v597, %v565
  %v1078 = vpack.c.b16 %v598, %v566
  %v1079 = vpack.c.b16 %v599, %v567
  %v1080 = vpack.c.b16 %v600, %v568
  %v1081 = vpack.c.b16 %v601, %v569
  %v1082 = vpack.c.b16 %v602, %v570
  %v1083 = vpack.c.b16 %v635, %v603
  %v1084 = vpack.c.b16 %v636, %v604
  %v1085 = vpack.c.b16 %v637, %v605
  %v1086 = vpack.c.b16 %v638, %v606
  %v1087 = vpack.c.b16 %v639, %v607
  %v1088 = vpack.c.b16 %v640, %v608
  %v1089 = vpack.c.b16 %v641, %v609
  %v1090 = vpack.c.b16 %v642, %v610
  %v1091 = vpack.c.b16 %v643, %v611
  %v1092 = vpack.c.b16 %v644, %v612
  %v1093 = vpack.c.b16 %v645, %v613
  %v1094 = vpack.c.b16 %v646, %v614
  %v1095 = vpack.c.b16 %v647, %v615
  %v1096 = vpack.c.b16 %v648, %v616
  %v1097 = vpack.c.b16 %v649, %v617
  %v1098 = vpack.c.b16 %v650, %v618
  %v1099 = vpack.c.b16 %v651, %v619
  %v1100 = vpack.c.b16 %v652, %v620
  %v1101 = vpack.c.b16 %v653, %v621
  %v1102 = vpack.c.b16 %v654, %v622
  %v1103 = vpack.c.b16 %v655, %v623
  %v1104 = vpack.c.b16 %v656, %v624
  %v1105 = vpack.c.b16 %v657, %v625
  %v1106 = vpack.c.b16 %v658, %v626
  %v1107 = vpack.c.b16 %v659, %v627
  %v1108 = vpack.c.b16 %v660, %v628
  %v1109 = vpack.c.b16 %v661, %v629
  %v1110 = vpack.c.b16 %v662, %v630
  %v1111 = vpack.c.b16 %v663, %v631
  %v1112 = vpack.c.b16 %v664, %v632
  %v1113 = vpack.c.b16 %v665, %v633
  %v1114 = vpack.c.b16 %v666, %v634
  %v1115 = vpack.c.b16 %v699, %v667
  %v1116 = vpack.c.b16 %v700, %v668
  %v1117 = vpack.c.b16 %v701, %v669
  %v1118 = vpack.c.b16 %v702, %v670
  %v1119 = vpack.c.b16 %v703, %v671
  %v1120 = vpack.c.b16 %v704, %v672
  %v1121 = vpack.c.b16 %v705, %v673
  %v1122 = vpack.c.b16 %v706, %v674
  %v1123 = vpack.c.b16 %v707, %v675
  %v1124 = vpack.c.b16 %v708, %v676
  %v1125 = vpack.c.b16 %v709, %v677
  %v1126 = vpack.c.b16 %v710, %v678
  %v1127 = vpack.c.b16 %v711, %v679
  %v1128 = vpack.c.b16 %v712, %v680
  %v1129 = vpack.c.b16 %v713, %v681
  %v1130 = vpack.c.b16 %v714, %v682
  %v1131 = vpack.c.b16 %v715, %v683
  %v1132 = vpack.c.b16 %v716, %v684
  %v1133 = vpack.c.b16 %v717, %v685
  %v1134 = vpack.c.b16 %v718, %v686
  %v1135 = vpack.c.b16 %v719, %v687
  %v1136 = vpack.c.b16 %v720, %v688
  %v1137 = vpack.c.b16 %v721, %v689
  %v1138 = vpack.c.b16 %v722, %v690
  %v1139 = vpack.c.b16 %v723, %v691
  %v1140 = vpack.c.b16 %v724, %v692
  %v1141 = vpack.c.b16 %v725, %v693
  %v1142 = vpack.c.b16 %v726, %v694
  %v1143 = vpack.c.b16 %v727, %v695
  %v1144 = vpack.c.b16 %v728, %v696
  %v1145 = vpack.c.b16 %v729, %v697
  %v1146 = vpack.c.b16 %v730, %v698
  %v1147 = vpack.c.b16 %v763, %v731
  %v1148 = vpack.c.b16 %v764, %v732
  %v1149 = vpack.c.b16 %v765, %v733
  %v1150 = vpack.c.b16 %v766, %v734
  %v1151 = vpack.c.b16 %v767, %v735
  %v1152 = vpack.c.b16 %v768, %v736
  %v1153 = vpack.c.b16 %v769, %v737
  %v1154 = vpack.c.b16 %v770, %v738
  %v1155 = vpack.c.b16 %v771, %v739
  %v1156 = vpack.c.b16 %v772, %v740
  %v1157 = vpack.c.b16 %v773, %v741
  %v1158 = vpack.c.b16 %v774, %v742
  %v1159 = vpack.c.b16 %v775, %v743
  %v1160 = vpack.c.b16 %v776, %v744
  %v1161 = vpack.c.b16 %v777, %v745
  %v1162 = vpack.c.b16 %v778, %v746
  %v1163 = vpack.c.b16 %v779, %v747
  %v1164 = vpack.c.b16 %v780, %v748
  %v1165 = vpack.c.b16 %v781, %v749
  %v1166 = vpack.c.b16 %v782, %v750
  %v1167 = vpack.c.b16 %v783, %v751
  %v1168 = vpack.c.b16 %v784, %v752
  %v1169 = vpack.c.b16 %v785, %v753
  %v1170 = vpack.c.b16 %v786, %v754
  %v1171 = vpack.c.b16 %v787, %v755
  %v1172 = vpack.c.b16 %v788, %v756
  %v1173 = vpack.c.b16 %v789, %v757
  %v1174 = vpack.c.b16 %v790, %v758
  %v1175 = vpack.c.b16 %v791, %v759
  %v1176 = vpack.c.b16 %v792, %v760
  %v1177 = vpack.c.b16 %v793, %v761
  %v1178 = vpack.c.b16 %v794, %v762
  %v1179 = vpack.c.b16 %v827, %v795
  %v1180 = vpack.c.b16 %v828, %v796
  %v1181 = vpack.c.b16 %v829, %v797
  %v1182 = vpack.c.b16 %v830, %v798
  %v1183 = vpack.c.b16 %v831, %v799
  %v1184 = vpack.c.b16 %v832, %v800
  %v1185 = vpack.c.b16 %v833, %v801
  %v1186 = vpack.c.b16 %v834, %v802
  %v1187 = vpack.c.b16 %v835, %v803
  %v1188 = vpack.c.b16 %v836, %v804
  %v1189 = vpack.c.b16 %v837, %v805
  %v1190 = vpack.c.b16 %v838, %v806
  %v1191 = vpack.c.b16 %v839, %v807
  %v1192 = vpack.c.b16 %v840, %v808
  %v1193 = vpack.c.b16 %v841, %v809
  %v1194 = vpack.c.b16 %v842, %v810
  %v1195 = vpack.c.b16 %v843, %v811
  %v1196 = vpack.c.b16 %v844, %v812
  %v1197 = vpack.c.b16 %v845, %v813
  %v1198 = vpack.c.b16 %v846, %v814
  %v1199 = vpack.c.b16 %v847, %v815
  %v1200 = vpack.c.b16 %v848, %v816
  %v1201 = vpack.c.b16 %v849, %v817
  %v1202 = vpack.c.b16 %v850, %v818
  %v1203 = vpack.c.b16 %v851, %v819
  %v1204 = vpack.c.b16 %v852, %v820
  %v1205 = vpack.c.b16 %v853, %v821
  %v1206 = vpack.c.b16 %v854, %v822
  %v1207 = vpack.c.b16 %v855, %v823
  %v1208 = vpack.c.b16 %v856, %v824
  %v1209 = vpack.c.b16 %v857, %v825
  %v1210 = vpack.c.b16 %v858, %v826
  %v1211 = vpack.c.b16 %v891, %v859
  %v1212 = vpack.c.b16 %v892, %v860
  %v1213 = vpack.c.b16 %v893, %v861
  %v1214 = vpack.c.b16 %v894, %v862
  %v1215 = vpack.c.b16 %v895, %v863
  %v1216 = vpack.c.b16 %v896, %v864
  %v1217 = vpack.c.b16 %v897, %v865
  %v1218 = vpack.c.b16 %v898, %v866
  %v1219 = vpack.c.b16 %v899, %v867
  %v1220 = vpack.c.b16 %v900, %v868
  %v1221 = vpack.c.b16 %v901, %v869
  %v1222 = vpack.c.b16 %v902, %v870
  %v1223 = vpack.c.b16 %v903, %v871
  %v1224 = vpack.c.b16 %v904, %v872
  %v1225 = vpack.c.b16 %v905, %v873
  %v1226 = vpack.c.b16 %v906, %v874
  %v1227 = vpack.c.b16 %v907, %v875
  %v1228 = vpack.c.b16 %v908, %v876
  %v1229 = vpack.c.b16 %v909, %v877
  %v1230 = vpack.c.b16 %v910, %v878
  %v1231 = vpack.c.b16 %v911, %v879
  %v1232 = vpack.c.b16 %v912, %v880
  %v1233 = vpack.c.b16 %v913, %v881
  %v1234 = vpack.c.b16 %v914, %v882
  %v1235 = vpack.c.b16 %v915, %v883
  %v1236 = vpack.c.b16 %v916, %v884
  %v1237 = vpack.c.b16 %v917, %v885
  %v1238 = vpack.c.b16 %v918, %v886
  %v1239 = vpack.c.b16 %v919, %v887
  %v1240 = vpack.c.b16 %v920, %v888
  %v1241 = vpack.c.b16 %v921, %v889
  %v1242 = vpack.c.b16 %v922, %v890
  %v1243 = vpack.c.b16 %v955, %v923
  %v1244 = vpack.c.b16 %v956, %v924
  %v1245 = vpack.c.b16 %v957, %v925
  %v1246 = vpack.c.b16 %v958, %v926
  %v1247 = vpack.c.b16 %v959, %v927
  %v1248 = vpack.c.b16 %v960, %v928
  %v1249 = vpack.c.b16 %v961, %v929
  %v1250 = vpack.c.b16 %v962, %v930
  %v1251 = vpack.c.b16 %v963, %v931
  %v1252 = vpack.c.b16 %v964, %v932
  %v1253 = vpack.c.b16 %v965, %v933
  %v1254 = vpack.c.b16 %v966, %v934
  %v1255 = vpack.c.b16 %v967, %v935
  %v1256 = vpack.c.b16 %v968, %v936
  %v1257 = vpack.c.b16 %v969, %v937
  %v1258 = vpack.c.b16 %v970, %v938
  %v1259 = vpack.c.b16 %v971, %v939
  %v1260 = vpack.c.b16 %v972, %v940
  %v1261 = vpack.c.b16 %v973, %v941
  %v1262 = vpack.c.b16 %v974, %v942
  %v1263 = vpack.c.b16 %v975, %v943
  %v1264 = vpack.c.b16 %v976, %v944
  %v1265 = vpack.c.b16 %v977, %v945
  %v1266 = vpack.c.b16 %v978, %v946
  %v1267 = vpack.c.b16 %v979, %v947
  %v1268 = vpack.c.b16 %v980, %v948
  %v1269 = vpack.c.b16 %v981, %v949
  %v1270 = vpack.c.b16 %v982, %v950
  %v1271 = vpack.c.b16 %v983, %v951
  %v1272 = vpack.c.b16 %v984, %v952
  %v1273 = vpack.c.b16 %v985, %v953
  %v1274 = vpack.c.b16 %v986, %v954
  %v1275 = vpack.c.b16 %v1019, %v987
  %v1276 = vpack.c.b16 %v1020, %v988
  %v1277 = vpack.c.b16 %v1021, %v989
  %v1278 = vpack.c.b16 %v1022, %v990
  %v1279 = vpack.c.b16 %v1023, %v991
  %v1280 = vpack.c.b16 %v1024, %v992
  %v1281 = vpack.c.b16 %v1025, %v993
  %v1282 = vpack.c.b16 %v1026, %v994
  %v1283 = vpack.c.b16 %v1027, %v995
  %v1284 = vpack.c.b16 %v1028, %v996
  %v1285 = vpack.c.b16 %v1029, %v997
  %v1286 = vpack.c.b16 %v1030, %v998
  %v1287 = vpack.c.b16 %v1031, %v999
  %v1288 = vpack.c.b16 %v1032, %v1000
  %v1289 = vpack.c.b16 %v1033, %v1001
  %v1290 = vpack.c.b16 %v1034, %v1002
  %v1291 = vpack.c.b16 %v1035, %v1003
  %v1292 = vpack.c.b16 %v1036, %v1004
  %v1293 = vpack.c.b16 %v1037, %v1005
  %v1294 = vpack.c.b16 %v1038, %v1006
  %v1295 = vpack.c.b16 %v1039, %v1007
  %v1296 = vpack.c.b16 %v1040, %v1008
  %v1297 = vpack.c.b16 %v1041, %v1009
  %v1298 = vpack.c.b16 %v1042, %v1010
  %v1299 = vpack.c.b16 %v1043, %v1011
  %v1300 = vpack.c.b16 %v1044, %v1012
  %v1301 = vpack.c.b16 %v1045, %v1013
  %v1302 = vpack.c.b16 %v1046, %v1014
  %v1303 = vpack.c.b16 %v1047, %v1015
  %v1304 = vpack.c.b16 %v1048, %v1016
  %v1305 = vpack.c.b16 %v1049, %v1017
  %v1306 = vpack.c.b16 %v1050, %v1018
  %1563 = vmatpush.bf16.msra.mxu0 %v1275
  %1564 = vmatpush.bf16.msra.mxu0 %v1243
  %1565 = vmatpush.bf16.msra.mxu0 %v1211
  %1566 = vmatpush.bf16.msra.mxu0 %v1179
  %1567 = vmatpush.bf16.msra.mxu0 %v1147
  %1568 = vmatpush.bf16.msra.mxu0 %v1115
  %1569 = vmatpush.bf16.msra.mxu0 %v1083
  %1570 = vmatpush.bf16.msra.mxu0 %v1051
  %1571 = vmatmul.bf16.gmra.mxu0 %v279
  %v1572 = vpop.f32.mrf.mxu0
  %v1573 = vadd.f32 0.0, %v1572
  %v1574 = vpop.f32.mrf.mxu0
  %v1575 = vadd.f32 0.0, %v1574
  %1576 = vmatmul.bf16.gmra.mxu0 %v280
  %v1577 = vpop.f32.mrf.mxu0
  %v1578 = vadd.f32 0.0, %v1577
  %v1579 = vpop.f32.mrf.mxu0
  %v1580 = vadd.f32 0.0, %v1579
  %1581 = vdwg.mxu0
  %1582 = vmatpush.bf16.msra.mxu0 %v1276
  %1583 = vmatpush.bf16.msra.mxu0 %v1244
  %1584 = vmatpush.bf16.msra.mxu0 %v1212
  %1585 = vmatpush.bf16.msra.mxu0 %v1180
  %1586 = vmatpush.bf16.msra.mxu0 %v1148
  %1587 = vmatpush.bf16.msra.mxu0 %v1116
  %1588 = vmatpush.bf16.msra.mxu0 %v1084
  %1589 = vmatpush.bf16.msra.mxu0 %v1052
  %1590 = vmatmul.bf16.gmra.mxu0 %v279
  %v1591 = vpop.f32.mrf.mxu0
  %v1592 = vadd.f32 0.0, %v1591
  %v1593 = vpop.f32.mrf.mxu0
  %v1594 = vadd.f32 0.0, %v1593
  %1595 = vmatmul.bf16.gmra.mxu0 %v280
  %v1596 = vpop.f32.mrf.mxu0
  %v1597 = vadd.f32 0.0, %v1596
  %v1598 = vpop.f32.mrf.mxu0
  %v1599 = vadd.f32 0.0, %v1598
  %1600 = vdwg.mxu0
  %1601 = vmatpush.bf16.msra.mxu0 %v1277
  %1602 = vmatpush.bf16.msra.mxu0 %v1245
  %1603 = vmatpush.bf16.msra.mxu0 %v1213
  %1604 = vmatpush.bf16.msra.mxu0 %v1181
  %1605 = vmatpush.bf16.msra.mxu0 %v1149
  %1606 = vmatpush.bf16.msra.mxu0 %v1117
  %1607 = vmatpush.bf16.msra.mxu0 %v1085
  %1608 = vmatpush.bf16.msra.mxu0 %v1053
  %1609 = vmatmul.bf16.gmra.mxu0 %v279
  %v1610 = vpop.f32.mrf.mxu0
  %v1611 = vadd.f32 0.0, %v1610
  %v1612 = vpop.f32.mrf.mxu0
  %v1613 = vadd.f32 0.0, %v1612
  %1614 = vmatmul.bf16.gmra.mxu0 %v280
  %v1615 = vpop.f32.mrf.mxu0
  %v1616 = vadd.f32 0.0, %v1615
  %v1617 = vpop.f32.mrf.mxu0
  %v1618 = vadd.f32 0.0, %v1617
  %1619 = vdwg.mxu0
  %1620 = vmatpush.bf16.msra.mxu0 %v1278
  %1621 = vmatpush.bf16.msra.mxu0 %v1246
  %1622 = vmatpush.bf16.msra.mxu0 %v1214
  %1623 = vmatpush.bf16.msra.mxu0 %v1182
  %1624 = vmatpush.bf16.msra.mxu0 %v1150
  %1625 = vmatpush.bf16.msra.mxu0 %v1118
  %1626 = vmatpush.bf16.msra.mxu0 %v1086
  %1627 = vmatpush.bf16.msra.mxu0 %v1054
  %1628 = vmatmul.bf16.gmra.mxu0 %v279
  %v1629 = vpop.f32.mrf.mxu0
  %v1630 = vadd.f32 0.0, %v1629
  %v1631 = vpop.f32.mrf.mxu0
  %v1632 = vadd.f32 0.0, %v1631
  %1633 = vmatmul.bf16.gmra.mxu0 %v280
  %v1634 = vpop.f32.mrf.mxu0
  %v1635 = vadd.f32 0.0, %v1634
  %v1636 = vpop.f32.mrf.mxu0
  %v1637 = vadd.f32 0.0, %v1636
  %1638 = vdwg.mxu0
  %1639 = vmatpush.bf16.msra.mxu0 %v1279
  %1640 = vmatpush.bf16.msra.mxu0 %v1247
  %1641 = vmatpush.bf16.msra.mxu0 %v1215
  %1642 = vmatpush.bf16.msra.mxu0 %v1183
  %1643 = vmatpush.bf16.msra.mxu0 %v1151
  %1644 = vmatpush.bf16.msra.mxu0 %v1119
  %1645 = vmatpush.bf16.msra.mxu0 %v1087
  %1646 = vmatpush.bf16.msra.mxu0 %v1055
  %1647 = vmatmul.bf16.gmra.mxu0 %v279
  %v1648 = vpop.f32.mrf.mxu0
  %v1649 = vadd.f32 0.0, %v1648
  %v1650 = vpop.f32.mrf.mxu0
  %v1651 = vadd.f32 0.0, %v1650
  %1652 = vmatmul.bf16.gmra.mxu0 %v280
  %v1653 = vpop.f32.mrf.mxu0
  %v1654 = vadd.f32 0.0, %v1653
  %v1655 = vpop.f32.mrf.mxu0
  %v1656 = vadd.f32 0.0, %v1655
  %1657 = vdwg.mxu0
  %1658 = vmatpush.bf16.msra.mxu0 %v1280
  %1659 = vmatpush.bf16.msra.mxu0 %v1248
  %1660 = vmatpush.bf16.msra.mxu0 %v1216
  %1661 = vmatpush.bf16.msra.mxu0 %v1184
  %1662 = vmatpush.bf16.msra.mxu0 %v1152
  %1663 = vmatpush.bf16.msra.mxu0 %v1120
  %1664 = vmatpush.bf16.msra.mxu0 %v1088
  %1665 = vmatpush.bf16.msra.mxu0 %v1056
  %1666 = vmatmul.bf16.gmra.mxu0 %v279
  %v1667 = vpop.f32.mrf.mxu0
  %v1668 = vadd.f32 0.0, %v1667
  %v1669 = vpop.f32.mrf.mxu0
  %v1670 = vadd.f32 0.0, %v1669
  %1671 = vmatmul.bf16.gmra.mxu0 %v280
  %v1672 = vpop.f32.mrf.mxu0
  %v1673 = vadd.f32 0.0, %v1672
  %v1674 = vpop.f32.mrf.mxu0
  %v1675 = vadd.f32 0.0, %v1674
  %1676 = vdwg.mxu0
  %1677 = vmatpush.bf16.msra.mxu0 %v1281
  %1678 = vmatpush.bf16.msra.mxu0 %v1249
  %1679 = vmatpush.bf16.msra.mxu0 %v1217
  %1680 = vmatpush.bf16.msra.mxu0 %v1185
  %1681 = vmatpush.bf16.msra.mxu0 %v1153
  %1682 = vmatpush.bf16.msra.mxu0 %v1121
  %1683 = vmatpush.bf16.msra.mxu0 %v1089
  %1684 = vmatpush.bf16.msra.mxu0 %v1057
  %1685 = vmatmul.bf16.gmra.mxu0 %v279
  %v1686 = vpop.f32.mrf.mxu0
  %v1687 = vadd.f32 0.0, %v1686
  %v1688 = vpop.f32.mrf.mxu0
  %v1689 = vadd.f32 0.0, %v1688
  %1690 = vmatmul.bf16.gmra.mxu0 %v280
  %v1691 = vpop.f32.mrf.mxu0
  %v1692 = vadd.f32 0.0, %v1691
  %v1693 = vpop.f32.mrf.mxu0
  %v1694 = vadd.f32 0.0, %v1693
  %1695 = vdwg.mxu0
  %1696 = vmatpush.bf16.msra.mxu0 %v1282
  %1697 = vmatpush.bf16.msra.mxu0 %v1250
  %1698 = vmatpush.bf16.msra.mxu0 %v1218
  %1699 = vmatpush.bf16.msra.mxu0 %v1186
  %1700 = vmatpush.bf16.msra.mxu0 %v1154
  %1701 = vmatpush.bf16.msra.mxu0 %v1122
  %1702 = vmatpush.bf16.msra.mxu0 %v1090
  %1703 = vmatpush.bf16.msra.mxu0 %v1058
  %1704 = vmatmul.bf16.gmra.mxu0 %v279
  %v1705 = vpop.f32.mrf.mxu0
  %v1706 = vadd.f32 0.0, %v1705
  %v1707 = vpop.f32.mrf.mxu0
  %v1708 = vadd.f32 0.0, %v1707
  %1709 = vmatmul.bf16.gmra.mxu0 %v280
  %v1710 = vpop.f32.mrf.mxu0
  %v1711 = vadd.f32 0.0, %v1710
  %v1712 = vpop.f32.mrf.mxu0
  %v1713 = vadd.f32 0.0, %v1712
  %1714 = vdwg.mxu0
  %1715 = vmatpush.bf16.msra.mxu0 %v1283
  %1716 = vmatpush.bf16.msra.mxu0 %v1251
  %1717 = vmatpush.bf16.msra.mxu0 %v1219
  %1718 = vmatpush.bf16.msra.mxu0 %v1187
  %1719 = vmatpush.bf16.msra.mxu0 %v1155
  %1720 = vmatpush.bf16.msra.mxu0 %v1123
  %1721 = vmatpush.bf16.msra.mxu0 %v1091
  %1722 = vmatpush.bf16.msra.mxu0 %v1059
  %1723 = vmatmul.bf16.gmra.mxu0 %v279
  %v1724 = vpop.f32.mrf.mxu0
  %v1725 = vadd.f32 0.0, %v1724
  %v1726 = vpop.f32.mrf.mxu0
  %v1727 = vadd.f32 0.0, %v1726
  %1728 = vmatmul.bf16.gmra.mxu0 %v280
  %v1729 = vpop.f32.mrf.mxu0
  %v1730 = vadd.f32 0.0, %v1729
  %v1731 = vpop.f32.mrf.mxu0
  %v1732 = vadd.f32 0.0, %v1731
  %1733 = vdwg.mxu0
  %1734 = vmatpush.bf16.msra.mxu0 %v1284
  %1735 = vmatpush.bf16.msra.mxu0 %v1252
  %1736 = vmatpush.bf16.msra.mxu0 %v1220
  %1737 = vmatpush.bf16.msra.mxu0 %v1188
  %1738 = vmatpush.bf16.msra.mxu0 %v1156
  %1739 = vmatpush.bf16.msra.mxu0 %v1124
  %1740 = vmatpush.bf16.msra.mxu0 %v1092
  %1741 = vmatpush.bf16.msra.mxu0 %v1060
  %1742 = vmatmul.bf16.gmra.mxu0 %v279
  %v1743 = vpop.f32.mrf.mxu0
  %v1744 = vadd.f32 0.0, %v1743
  %v1745 = vpop.f32.mrf.mxu0
  %v1746 = vadd.f32 0.0, %v1745
  %1747 = vmatmul.bf16.gmra.mxu0 %v280
  %v1748 = vpop.f32.mrf.mxu0
  %v1749 = vadd.f32 0.0, %v1748
  %v1750 = vpop.f32.mrf.mxu0
  %v1751 = vadd.f32 0.0, %v1750
  %1752 = vdwg.mxu0
  %1753 = vmatpush.bf16.msra.mxu0 %v1285
  %1754 = vmatpush.bf16.msra.mxu0 %v1253
  %1755 = vmatpush.bf16.msra.mxu0 %v1221
  %1756 = vmatpush.bf16.msra.mxu0 %v1189
  %1757 = vmatpush.bf16.msra.mxu0 %v1157
  %1758 = vmatpush.bf16.msra.mxu0 %v1125
  %1759 = vmatpush.bf16.msra.mxu0 %v1093
  %1760 = vmatpush.bf16.msra.mxu0 %v1061
  %1761 = vmatmul.bf16.gmra.mxu0 %v279
  %v1762 = vpop.f32.mrf.mxu0
  %v1763 = vadd.f32 0.0, %v1762
  %v1764 = vpop.f32.mrf.mxu0
  %v1765 = vadd.f32 0.0, %v1764
  %1766 = vmatmul.bf16.gmra.mxu0 %v280
  %v1767 = vpop.f32.mrf.mxu0
  %v1768 = vadd.f32 0.0, %v1767
  %v1769 = vpop.f32.mrf.mxu0
  %v1770 = vadd.f32 0.0, %v1769
  %1771 = vdwg.mxu0
  %1772 = vmatpush.bf16.msra.mxu0 %v1286
  %1773 = vmatpush.bf16.msra.mxu0 %v1254
  %1774 = vmatpush.bf16.msra.mxu0 %v1222
  %1775 = vmatpush.bf16.msra.mxu0 %v1190
  %1776 = vmatpush.bf16.msra.mxu0 %v1158
  %1777 = vmatpush.bf16.msra.mxu0 %v1126
  %1778 = vmatpush.bf16.msra.mxu0 %v1094
  %1779 = vmatpush.bf16.msra.mxu0 %v1062
  %1780 = vmatmul.bf16.gmra.mxu0 %v279
  %v1781 = vpop.f32.mrf.mxu0
  %v1782 = vadd.f32 0.0, %v1781
  %v1783 = vpop.f32.mrf.mxu0
  %v1784 = vadd.f32 0.0, %v1783
  %1785 = vmatmul.bf16.gmra.mxu0 %v280
  %v1786 = vpop.f32.mrf.mxu0
  %v1787 = vadd.f32 0.0, %v1786
  %v1788 = vpop.f32.mrf.mxu0
  %v1789 = vadd.f32 0.0, %v1788
  %1790 = vdwg.mxu0
  %1791 = vmatpush.bf16.msra.mxu0 %v1287
  %1792 = vmatpush.bf16.msra.mxu0 %v1255
  %1793 = vmatpush.bf16.msra.mxu0 %v1223
  %1794 = vmatpush.bf16.msra.mxu0 %v1191
  %1795 = vmatpush.bf16.msra.mxu0 %v1159
  %1796 = vmatpush.bf16.msra.mxu0 %v1127
  %1797 = vmatpush.bf16.msra.mxu0 %v1095
  %1798 = vmatpush.bf16.msra.mxu0 %v1063
  %1799 = vmatmul.bf16.gmra.mxu0 %v279
  %v1800 = vpop.f32.mrf.mxu0
  %v1801 = vadd.f32 0.0, %v1800
  %v1802 = vpop.f32.mrf.mxu0
  %v1803 = vadd.f32 0.0, %v1802
  %1804 = vmatmul.bf16.gmra.mxu0 %v280
  %v1805 = vpop.f32.mrf.mxu0
  %v1806 = vadd.f32 0.0, %v1805
  %v1807 = vpop.f32.mrf.mxu0
  %v1808 = vadd.f32 0.0, %v1807
  %1809 = vdwg.mxu0
  %1810 = vmatpush.bf16.msra.mxu0 %v1288
  %1811 = vmatpush.bf16.msra.mxu0 %v1256
  %1812 = vmatpush.bf16.msra.mxu0 %v1224
  %1813 = vmatpush.bf16.msra.mxu0 %v1192
  %1814 = vmatpush.bf16.msra.mxu0 %v1160
  %1815 = vmatpush.bf16.msra.mxu0 %v1128
  %1816 = vmatpush.bf16.msra.mxu0 %v1096
  %1817 = vmatpush.bf16.msra.mxu0 %v1064
  %1818 = vmatmul.bf16.gmra.mxu0 %v279
  %v1819 = vpop.f32.mrf.mxu0
  %v1820 = vadd.f32 0.0, %v1819
  %v1821 = vpop.f32.mrf.mxu0
  %v1822 = vadd.f32 0.0, %v1821
  %1823 = vmatmul.bf16.gmra.mxu0 %v280
  %v1824 = vpop.f32.mrf.mxu0
  %v1825 = vadd.f32 0.0, %v1824
  %v1826 = vpop.f32.mrf.mxu0
  %v1827 = vadd.f32 0.0, %v1826
  %1828 = vdwg.mxu0
  %1829 = vmatpush.bf16.msra.mxu0 %v1289
  %1830 = vmatpush.bf16.msra.mxu0 %v1257
  %1831 = vmatpush.bf16.msra.mxu0 %v1225
  %1832 = vmatpush.bf16.msra.mxu0 %v1193
  %1833 = vmatpush.bf16.msra.mxu0 %v1161
  %1834 = vmatpush.bf16.msra.mxu0 %v1129
  %1835 = vmatpush.bf16.msra.mxu0 %v1097
  %1836 = vmatpush.bf16.msra.mxu0 %v1065
  %1837 = vmatmul.bf16.gmra.mxu0 %v279
  %v1838 = vpop.f32.mrf.mxu0
  %v1839 = vadd.f32 0.0, %v1838
  %v1840 = vpop.f32.mrf.mxu0
  %v1841 = vadd.f32 0.0, %v1840
  %1842 = vmatmul.bf16.gmra.mxu0 %v280
  %v1843 = vpop.f32.mrf.mxu0
  %v1844 = vadd.f32 0.0, %v1843
  %v1845 = vpop.f32.mrf.mxu0
  %v1846 = vadd.f32 0.0, %v1845
  %1847 = vdwg.mxu0
  %1848 = vmatpush.bf16.msra.mxu0 %v1290
  %1849 = vmatpush.bf16.msra.mxu0 %v1258
  %1850 = vmatpush.bf16.msra.mxu0 %v1226
  %1851 = vmatpush.bf16.msra.mxu0 %v1194
  %1852 = vmatpush.bf16.msra.mxu0 %v1162
  %1853 = vmatpush.bf16.msra.mxu0 %v1130
  %1854 = vmatpush.bf16.msra.mxu0 %v1098
  %1855 = vmatpush.bf16.msra.mxu0 %v1066
  %1856 = vmatmul.bf16.gmra.mxu0 %v279
  %v1857 = vpop.f32.mrf.mxu0
  %v1858 = vadd.f32 0.0, %v1857
  %v1859 = vpop.f32.mrf.mxu0
  %v1860 = vadd.f32 0.0, %v1859
  %1861 = vmatmul.bf16.gmra.mxu0 %v280
  %v1862 = vpop.f32.mrf.mxu0
  %v1863 = vadd.f32 0.0, %v1862
  %v1864 = vpop.f32.mrf.mxu0
  %v1865 = vadd.f32 0.0, %v1864
  %1866 = vdwg.mxu0
  %1867 = vmatpush.bf16.msra.mxu0 %v1291
  %1868 = vmatpush.bf16.msra.mxu0 %v1259
  %1869 = vmatpush.bf16.msra.mxu0 %v1227
  %1870 = vmatpush.bf16.msra.mxu0 %v1195
  %1871 = vmatpush.bf16.msra.mxu0 %v1163
  %1872 = vmatpush.bf16.msra.mxu0 %v1131
  %1873 = vmatpush.bf16.msra.mxu0 %v1099
  %1874 = vmatpush.bf16.msra.mxu0 %v1067
  %1875 = vmatmul.bf16.gmra.mxu0 %v279
  %v1876 = vpop.f32.mrf.mxu0
  %v1877 = vadd.f32 0.0, %v1876
  %v1878 = vpop.f32.mrf.mxu0
  %v1879 = vadd.f32 0.0, %v1878
  %1880 = vmatmul.bf16.gmra.mxu0 %v280
  %v1881 = vpop.f32.mrf.mxu0
  %v1882 = vadd.f32 0.0, %v1881
  %v1883 = vpop.f32.mrf.mxu0
  %v1884 = vadd.f32 0.0, %v1883
  %1885 = vdwg.mxu0
  %1886 = vmatpush.bf16.msra.mxu0 %v1292
  %1887 = vmatpush.bf16.msra.mxu0 %v1260
  %1888 = vmatpush.bf16.msra.mxu0 %v1228
  %1889 = vmatpush.bf16.msra.mxu0 %v1196
  %1890 = vmatpush.bf16.msra.mxu0 %v1164
  %1891 = vmatpush.bf16.msra.mxu0 %v1132
  %1892 = vmatpush.bf16.msra.mxu0 %v1100
  %1893 = vmatpush.bf16.msra.mxu0 %v1068
  %1894 = vmatmul.bf16.gmra.mxu0 %v279
  %v1895 = vpop.f32.mrf.mxu0
  %v1896 = vadd.f32 0.0, %v1895
  %v1897 = vpop.f32.mrf.mxu0
  %v1898 = vadd.f32 0.0, %v1897
  %1899 = vmatmul.bf16.gmra.mxu0 %v280
  %v1900 = vpop.f32.mrf.mxu0
  %v1901 = vadd.f32 0.0, %v1900
  %v1902 = vpop.f32.mrf.mxu0
  %v1903 = vadd.f32 0.0, %v1902
  %1904 = vdwg.mxu0
  %1905 = vmatpush.bf16.msra.mxu0 %v1293
  %1906 = vmatpush.bf16.msra.mxu0 %v1261
  %1907 = vmatpush.bf16.msra.mxu0 %v1229
  %1908 = vmatpush.bf16.msra.mxu0 %v1197
  %1909 = vmatpush.bf16.msra.mxu0 %v1165
  %1910 = vmatpush.bf16.msra.mxu0 %v1133
  %1911 = vmatpush.bf16.msra.mxu0 %v1101
  %1912 = vmatpush.bf16.msra.mxu0 %v1069
  %1913 = vmatmul.bf16.gmra.mxu0 %v279
  %v1914 = vpop.f32.mrf.mxu0
  %v1915 = vadd.f32 0.0, %v1914
  %v1916 = vpop.f32.mrf.mxu0
  %v1917 = vadd.f32 0.0, %v1916
  %1918 = vmatmul.bf16.gmra.mxu0 %v280
  %v1919 = vpop.f32.mrf.mxu0
  %v1920 = vadd.f32 0.0, %v1919
  %v1921 = vpop.f32.mrf.mxu0
  %v1922 = vadd.f32 0.0, %v1921
  %1923 = vdwg.mxu0
  %1924 = vmatpush.bf16.msra.mxu0 %v1294
  %1925 = vmatpush.bf16.msra.mxu0 %v1262
  %1926 = vmatpush.bf16.msra.mxu0 %v1230
  %1927 = vmatpush.bf16.msra.mxu0 %v1198
  %1928 = vmatpush.bf16.msra.mxu0 %v1166
  %1929 = vmatpush.bf16.msra.mxu0 %v1134
  %1930 = vmatpush.bf16.msra.mxu0 %v1102
  %1931 = vmatpush.bf16.msra.mxu0 %v1070
  %1932 = vmatmul.bf16.gmra.mxu0 %v279
  %v1933 = vpop.f32.mrf.mxu0
  %v1934 = vadd.f32 0.0, %v1933
  %v1935 = vpop.f32.mrf.mxu0
  %v1936 = vadd.f32 0.0, %v1935
  %1937 = vmatmul.bf16.gmra.mxu0 %v280
  %v1938 = vpop.f32.mrf.mxu0
  %v1939 = vadd.f32 0.0, %v1938
  %v1940 = vpop.f32.mrf.mxu0
  %v1941 = vadd.f32 0.0, %v1940
  %1942 = vdwg.mxu0
  %1943 = vmatpush.bf16.msra.mxu0 %v1295
  %1944 = vmatpush.bf16.msra.mxu0 %v1263
  %1945 = vmatpush.bf16.msra.mxu0 %v1231
  %1946 = vmatpush.bf16.msra.mxu0 %v1199
  %1947 = vmatpush.bf16.msra.mxu0 %v1167
  %1948 = vmatpush.bf16.msra.mxu0 %v1135
  %1949 = vmatpush.bf16.msra.mxu0 %v1103
  %1950 = vmatpush.bf16.msra.mxu0 %v1071
  %1951 = vmatmul.bf16.gmra.mxu0 %v279
  %v1952 = vpop.f32.mrf.mxu0
  %v1953 = vadd.f32 0.0, %v1952
  %v1954 = vpop.f32.mrf.mxu0
  %v1955 = vadd.f32 0.0, %v1954
  %1956 = vmatmul.bf16.gmra.mxu0 %v280
  %v1957 = vpop.f32.mrf.mxu0
  %v1958 = vadd.f32 0.0, %v1957
  %v1959 = vpop.f32.mrf.mxu0
  %v1960 = vadd.f32 0.0, %v1959
  %1961 = vdwg.mxu0
  %1962 = vmatpush.bf16.msra.mxu0 %v1296
  %1963 = vmatpush.bf16.msra.mxu0 %v1264
  %1964 = vmatpush.bf16.msra.mxu0 %v1232
  %1965 = vmatpush.bf16.msra.mxu0 %v1200
  %1966 = vmatpush.bf16.msra.mxu0 %v1168
  %1967 = vmatpush.bf16.msra.mxu0 %v1136
  %1968 = vmatpush.bf16.msra.mxu0 %v1104
  %1969 = vmatpush.bf16.msra.mxu0 %v1072
  %1970 = vmatmul.bf16.gmra.mxu0 %v279
  %v1971 = vpop.f32.mrf.mxu0
  %v1972 = vadd.f32 0.0, %v1971
  %v1973 = vpop.f32.mrf.mxu0
  %v1974 = vadd.f32 0.0, %v1973
  %1975 = vmatmul.bf16.gmra.mxu0 %v280
  %v1976 = vpop.f32.mrf.mxu0
  %v1977 = vadd.f32 0.0, %v1976
  %v1978 = vpop.f32.mrf.mxu0
  %v1979 = vadd.f32 0.0, %v1978
  %1980 = vdwg.mxu0
  %1981 = vmatpush.bf16.msra.mxu0 %v1297
  %1982 = vmatpush.bf16.msra.mxu0 %v1265
  %1983 = vmatpush.bf16.msra.mxu0 %v1233
  %1984 = vmatpush.bf16.msra.mxu0 %v1201
  %1985 = vmatpush.bf16.msra.mxu0 %v1169
  %1986 = vmatpush.bf16.msra.mxu0 %v1137
  %1987 = vmatpush.bf16.msra.mxu0 %v1105
  %1988 = vmatpush.bf16.msra.mxu0 %v1073
  %1989 = vmatmul.bf16.gmra.mxu0 %v279
  %v1990 = vpop.f32.mrf.mxu0
  %v1991 = vadd.f32 0.0, %v1990
  %v1992 = vpop.f32.mrf.mxu0
  %v1993 = vadd.f32 0.0, %v1992
  %1994 = vmatmul.bf16.gmra.mxu0 %v280
  %v1995 = vpop.f32.mrf.mxu0
  %v1996 = vadd.f32 0.0, %v1995
  %v1997 = vpop.f32.mrf.mxu0
  %v1998 = vadd.f32 0.0, %v1997
  %1999 = vdwg.mxu0
  %2000 = vmatpush.bf16.msra.mxu0 %v1298
  %2001 = vmatpush.bf16.msra.mxu0 %v1266
  %2002 = vmatpush.bf16.msra.mxu0 %v1234
  %2003 = vmatpush.bf16.msra.mxu0 %v1202
  %2004 = vmatpush.bf16.msra.mxu0 %v1170
  %2005 = vmatpush.bf16.msra.mxu0 %v1138
  %2006 = vmatpush.bf16.msra.mxu0 %v1106
  %2007 = vmatpush.bf16.msra.mxu0 %v1074
  %2008 = vmatmul.bf16.gmra.mxu0 %v279
  %v2009 = vpop.f32.mrf.mxu0
  %v2010 = vadd.f32 0.0, %v2009
  %v2011 = vpop.f32.mrf.mxu0
  %v2012 = vadd.f32 0.0, %v2011
  %2013 = vmatmul.bf16.gmra.mxu0 %v280
  %v2014 = vpop.f32.mrf.mxu0
  %v2015 = vadd.f32 0.0, %v2014
  %v2016 = vpop.f32.mrf.mxu0
  %v2017 = vadd.f32 0.0, %v2016
  %2018 = vdwg.mxu0
  %2019 = vmatpush.bf16.msra.mxu0 %v1299
  %2020 = vmatpush.bf16.msra.mxu0 %v1267
  %2021 = vmatpush.bf16.msra.mxu0 %v1235
  %2022 = vmatpush.bf16.msra.mxu0 %v1203
  %2023 = vmatpush.bf16.msra.mxu0 %v1171
  %2024 = vmatpush.bf16.msra.mxu0 %v1139
  %2025 = vmatpush.bf16.msra.mxu0 %v1107
  %2026 = vmatpush.bf16.msra.mxu0 %v1075
  %2027 = vmatmul.bf16.gmra.mxu0 %v279
  %v2028 = vpop.f32.mrf.mxu0
  %v2029 = vadd.f32 0.0, %v2028
  %v2030 = vpop.f32.mrf.mxu0
  %v2031 = vadd.f32 0.0, %v2030
  %2032 = vmatmul.bf16.gmra.mxu0 %v280
  %v2033 = vpop.f32.mrf.mxu0
  %v2034 = vadd.f32 0.0, %v2033
  %v2035 = vpop.f32.mrf.mxu0
  %v2036 = vadd.f32 0.0, %v2035
  %2037 = vdwg.mxu0
  %2038 = vmatpush.bf16.msra.mxu0 %v1300
  %2039 = vmatpush.bf16.msra.mxu0 %v1268
  %2040 = vmatpush.bf16.msra.mxu0 %v1236
  %2041 = vmatpush.bf16.msra.mxu0 %v1204
  %2042 = vmatpush.bf16.msra.mxu0 %v1172
  %2043 = vmatpush.bf16.msra.mxu0 %v1140
  %2044 = vmatpush.bf16.msra.mxu0 %v1108
  %2045 = vmatpush.bf16.msra.mxu0 %v1076
  %2046 = vmatmul.bf16.gmra.mxu0 %v279
  %v2047 = vpop.f32.mrf.mxu0
  %v2048 = vadd.f32 0.0, %v2047
  %v2049 = vpop.f32.mrf.mxu0
  %v2050 = vadd.f32 0.0, %v2049
  %2051 = vmatmul.bf16.gmra.mxu0 %v280
  %v2052 = vpop.f32.mrf.mxu0
  %v2053 = vadd.f32 0.0, %v2052
  %v2054 = vpop.f32.mrf.mxu0
  %v2055 = vadd.f32 0.0, %v2054
  %2056 = vdwg.mxu0
  %2057 = vmatpush.bf16.msra.mxu0 %v1301
  %2058 = vmatpush.bf16.msra.mxu0 %v1269
  %2059 = vmatpush.bf16.msra.mxu0 %v1237
  %2060 = vmatpush.bf16.msra.mxu0 %v1205
  %2061 = vmatpush.bf16.msra.mxu0 %v1173
  %2062 = vmatpush.bf16.msra.mxu0 %v1141
  %2063 = vmatpush.bf16.msra.mxu0 %v1109
  %2064 = vmatpush.bf16.msra.mxu0 %v1077
  %2065 = vmatmul.bf16.gmra.mxu0 %v279
  %v2066 = vpop.f32.mrf.mxu0
  %v2067 = vadd.f32 0.0, %v2066
  %v2068 = vpop.f32.mrf.mxu0
  %v2069 = vadd.f32 0.0, %v2068
  %2070 = vmatmul.bf16.gmra.mxu0 %v280
  %v2071 = vpop.f32.mrf.mxu0
  %v2072 = vadd.f32 0.0, %v2071
  %v2073 = vpop.f32.mrf.mxu0
  %v2074 = vadd.f32 0.0, %v2073
  %2075 = vdwg.mxu0
  %2076 = vmatpush.bf16.msra.mxu0 %v1302
  %2077 = vmatpush.bf16.msra.mxu0 %v1270
  %2078 = vmatpush.bf16.msra.mxu0 %v1238
  %2079 = vmatpush.bf16.msra.mxu0 %v1206
  %2080 = vmatpush.bf16.msra.mxu0 %v1174
  %2081 = vmatpush.bf16.msra.mxu0 %v1142
  %2082 = vmatpush.bf16.msra.mxu0 %v1110
  %2083 = vmatpush.bf16.msra.mxu0 %v1078
  %2084 = vmatmul.bf16.gmra.mxu0 %v279
  %v2085 = vpop.f32.mrf.mxu0
  %v2086 = vadd.f32 0.0, %v2085
  %v2087 = vpop.f32.mrf.mxu0
  %v2088 = vadd.f32 0.0, %v2087
  %2089 = vmatmul.bf16.gmra.mxu0 %v280
  %v2090 = vpop.f32.mrf.mxu0
  %v2091 = vadd.f32 0.0, %v2090
  %v2092 = vpop.f32.mrf.mxu0
  %v2093 = vadd.f32 0.0, %v2092
  %2094 = vdwg.mxu0
  %2095 = vmatpush.bf16.msra.mxu0 %v1303
  %2096 = vmatpush.bf16.msra.mxu0 %v1271
  %2097 = vmatpush.bf16.msra.mxu0 %v1239
  %2098 = vmatpush.bf16.msra.mxu0 %v1207
  %2099 = vmatpush.bf16.msra.mxu0 %v1175
  %2100 = vmatpush.bf16.msra.mxu0 %v1143
  %2101 = vmatpush.bf16.msra.mxu0 %v1111
  %2102 = vmatpush.bf16.msra.mxu0 %v1079
  %2103 = vmatmul.bf16.gmra.mxu0 %v279
  %v2104 = vpop.f32.mrf.mxu0
  %v2105 = vadd.f32 0.0, %v2104
  %v2106 = vpop.f32.mrf.mxu0
  %v2107 = vadd.f32 0.0, %v2106
  %2108 = vmatmul.bf16.gmra.mxu0 %v280
  %v2109 = vpop.f32.mrf.mxu0
  %v2110 = vadd.f32 0.0, %v2109
  %v2111 = vpop.f32.mrf.mxu0
  %v2112 = vadd.f32 0.0, %v2111
  %2113 = vdwg.mxu0
  %2114 = vmatpush.bf16.msra.mxu0 %v1304
  %2115 = vmatpush.bf16.msra.mxu0 %v1272
  %2116 = vmatpush.bf16.msra.mxu0 %v1240
  %2117 = vmatpush.bf16.msra.mxu0 %v1208
  %2118 = vmatpush.bf16.msra.mxu0 %v1176
  %2119 = vmatpush.bf16.msra.mxu0 %v1144
  %2120 = vmatpush.bf16.msra.mxu0 %v1112
  %2121 = vmatpush.bf16.msra.mxu0 %v1080
  %2122 = vmatmul.bf16.gmra.mxu0 %v279
  %v2123 = vpop.f32.mrf.mxu0
  %v2124 = vadd.f32 0.0, %v2123
  %v2125 = vpop.f32.mrf.mxu0
  %v2126 = vadd.f32 0.0, %v2125
  %2127 = vmatmul.bf16.gmra.mxu0 %v280
  %v2128 = vpop.f32.mrf.mxu0
  %v2129 = vadd.f32 0.0, %v2128
  %v2130 = vpop.f32.mrf.mxu0
  %v2131 = vadd.f32 0.0, %v2130
  %2132 = vdwg.mxu0
  %2133 = vmatpush.bf16.msra.mxu0 %v1305
  %2134 = vmatpush.bf16.msra.mxu0 %v1273
  %2135 = vmatpush.bf16.msra.mxu0 %v1241
  %2136 = vmatpush.bf16.msra.mxu0 %v1209
  %2137 = vmatpush.bf16.msra.mxu0 %v1177
  %2138 = vmatpush.bf16.msra.mxu0 %v1145
  %2139 = vmatpush.bf16.msra.mxu0 %v1113
  %2140 = vmatpush.bf16.msra.mxu0 %v1081
  %2141 = vmatmul.bf16.gmra.mxu0 %v279
  %v2142 = vpop.f32.mrf.mxu0
  %v2143 = vadd.f32 0.0, %v2142
  %v2144 = vpop.f32.mrf.mxu0
  %v2145 = vadd.f32 0.0, %v2144
  %2146 = vmatmul.bf16.gmra.mxu0 %v280
  %v2147 = vpop.f32.mrf.mxu0
  %v2148 = vadd.f32 0.0, %v2147
  %v2149 = vpop.f32.mrf.mxu0
  %v2150 = vadd.f32 0.0, %v2149
  %2151 = vdwg.mxu0
  %2152 = vmatpush.bf16.msra.mxu0 %v1306
  %2153 = vmatpush.bf16.msra.mxu0 %v1274
  %2154 = vmatpush.bf16.msra.mxu0 %v1242
  %2155 = vmatpush.bf16.msra.mxu0 %v1210
  %2156 = vmatpush.bf16.msra.mxu0 %v1178
  %2157 = vmatpush.bf16.msra.mxu0 %v1146
  %2158 = vmatpush.bf16.msra.mxu0 %v1114
  %2159 = vmatpush.bf16.msra.mxu0 %v1082
  %2160 = vmatmul.bf16.gmra.mxu0 %v279
  %v2161 = vpop.f32.mrf.mxu0
  %v2162 = vadd.f32 0.0, %v2161
  %v2163 = vpop.f32.mrf.mxu0
  %v2164 = vadd.f32 0.0, %v2163
  %2165 = vmatmul.bf16.gmra.mxu0 %v280
  %v2166 = vpop.f32.mrf.mxu0
  %v2167 = vadd.f32 0.0, %v2166
  %v2168 = vpop.f32.mrf.mxu0
  %v2169 = vadd.f32 0.0, %v2168
  %2170 = vdwg.mxu0
  %v2171 = vpack.c.bf16 %v1592, %v1573
  %v2172 = vpack.c.bf16 %v1630, %v1611
  %v2173 = vpack.c.bf16 %v1668, %v1649
  %v2174 = vpack.c.bf16 %v1706, %v1687
  %v2175 = vpack.c.bf16 %v1744, %v1725
  %v2176 = vpack.c.bf16 %v1782, %v1763
  %v2177 = vpack.c.bf16 %v1820, %v1801
  %v2178 = vpack.c.bf16 %v1858, %v1839
  %v2179 = vpack.c.bf16 %v1896, %v1877
  %v2180 = vpack.c.bf16 %v1934, %v1915
  %v2181 = vpack.c.bf16 %v1972, %v1953
  %v2182 = vpack.c.bf16 %v2010, %v1991
  %v2183 = vpack.c.bf16 %v2048, %v2029
  %v2184 = vpack.c.bf16 %v2086, %v2067
  %v2185 = vpack.c.bf16 %v2124, %v2105
  %v2186 = vpack.c.bf16 %v2162, %v2143
  %v2187 = vpack.c.bf16 %v1594, %v1575
  %v2188 = vpack.c.bf16 %v1632, %v1613
  %v2189 = vpack.c.bf16 %v1670, %v1651
  %v2190 = vpack.c.bf16 %v1708, %v1689
  %v2191 = vpack.c.bf16 %v1746, %v1727
  %v2192 = vpack.c.bf16 %v1784, %v1765
  %v2193 = vpack.c.bf16 %v1822, %v1803
  %v2194 = vpack.c.bf16 %v1860, %v1841
  %v2195 = vpack.c.bf16 %v1898, %v1879
  %v2196 = vpack.c.bf16 %v1936, %v1917
  %v2197 = vpack.c.bf16 %v1974, %v1955
  %v2198 = vpack.c.bf16 %v2012, %v1993
  %v2199 = vpack.c.bf16 %v2050, %v2031
  %v2200 = vpack.c.bf16 %v2088, %v2069
  %v2201 = vpack.c.bf16 %v2126, %v2107
  %v2202 = vpack.c.bf16 %v2164, %v2145
  %v2203 = vpack.c.bf16 %v1597, %v1578
  %v2204 = vpack.c.bf16 %v1635, %v1616
  %v2205 = vpack.c.bf16 %v1673, %v1654
  %v2206 = vpack.c.bf16 %v1711, %v1692
  %v2207 = vpack.c.bf16 %v1749, %v1730
  %v2208 = vpack.c.bf16 %v1787, %v1768
  %v2209 = vpack.c.bf16 %v1825, %v1806
  %v2210 = vpack.c.bf16 %v1863, %v1844
  %v2211 = vpack.c.bf16 %v1901, %v1882
  %v2212 = vpack.c.bf16 %v1939, %v1920
  %v2213 = vpack.c.bf16 %v1977, %v1958
  %v2214 = vpack.c.bf16 %v2015, %v1996
  %v2215 = vpack.c.bf16 %v2053, %v2034
  %v2216 = vpack.c.bf16 %v2091, %v2072
  %v2217 = vpack.c.bf16 %v2129, %v2110
  %v2218 = vpack.c.bf16 %v2167, %v2148
  %v2219 = vpack.c.bf16 %v1599, %v1580
  %v2220 = vpack.c.bf16 %v1637, %v1618
  %v2221 = vpack.c.bf16 %v1675, %v1656
  %v2222 = vpack.c.bf16 %v1713, %v1694
  %v2223 = vpack.c.bf16 %v1751, %v1732
  %v2224 = vpack.c.bf16 %v1789, %v1770
  %v2225 = vpack.c.bf16 %v1827, %v1808
  %v2226 = vpack.c.bf16 %v1865, %v1846
  %v2227 = vpack.c.bf16 %v1903, %v1884
  %v2228 = vpack.c.bf16 %v1941, %v1922
  %v2229 = vpack.c.bf16 %v1979, %v1960
  %v2230 = vpack.c.bf16 %v2017, %v1998
  %v2231 = vpack.c.bf16 %v2055, %v2036
  %v2232 = vpack.c.bf16 %v2093, %v2074
  %v2233 = vpack.c.bf16 %v2131, %v2112
  %v2234 = vpack.c.bf16 %v2169, %v2150
  %2235 = vst [vmem:[%s2] sm:$0xff] %v2171
  %2236 = vst [vmem:[%s2 + $0x8] sm:$0xff] %v2172
  %2237 = vst [vmem:[%s2 + $0x10] sm:$0xff] %v2173
  %2238 = vst [vmem:[%s2 + $0x18] sm:$0xff] %v2174
  %2239 = vst [vmem:[%s2 + $0x20] sm:$0xff] %v2175
  %2240 = vst [vmem:[%s2 + $0x28] sm:$0xff] %v2176
  %2241 = vst [vmem:[%s2 + $0x30] sm:$0xff] %v2177
  %2242 = vst [vmem:[%s2 + $0x38] sm:$0xff] %v2178
  %2243 = vst [vmem:[%s2 + $0x40] sm:$0xff] %v2179
  %2244 = vst [vmem:[%s2 + $0x48] sm:$0xff] %v2180
  %2245 = vst [vmem:[%s2 + $0x50] sm:$0xff] %v2181
  %2246 = vst [vmem:[%s2 + $0x58] sm:$0xff] %v2182
  %2247 = vst [vmem:[%s2 + $0x60] sm:$0xff] %v2183
  %2248 = vst [vmem:[%s2 + $0x68] sm:$0xff] %v2184
  %2249 = vst [vmem:[%s2 + $0x70] sm:$0xff] %v2185
  %2250 = vst [vmem:[%s2 + $0x78] sm:$0xff] %v2186
  %2251 = vst [vmem:[%s2 + $0x80] sm:$0xff] %v2187
  %2252 = vst [vmem:[%s2 + $0x88] sm:$0xff] %v2188
  %2253 = vst [vmem:[%s2 + $0x90] sm:$0xff] %v2189
  %2254 = vst [vmem:[%s2 + $0x98] sm:$0xff] %v2190
  %2255 = vst [vmem:[%s2 + $0xa0] sm:$0xff] %v2191
  %2256 = vst [vmem:[%s2 + $0xa8] sm:$0xff] %v2192
  %2257 = vst [vmem:[%s2 + $0xb0] sm:$0xff] %v2193
  %2258 = vst [vmem:[%s2 + $0xb8] sm:$0xff] %v2194
  %2259 = vst [vmem:[%s2 + $0xc0] sm:$0xff] %v2195
  %2260 = vst [vmem:[%s2 + $0xc8] sm:$0xff] %v2196
  %2261 = vst [vmem:[%s2 + $0xd0] sm:$0xff] %v2197
  %2262 = vst [vmem:[%s2 + $0xd8] sm:$0xff] %v2198
  %2263 = vst [vmem:[%s2 + $0xe0] sm:$0xff] %v2199
  %2264 = vst [vmem:[%s2 + $0xe8] sm:$0xff] %v2200
  %2265 = vst [vmem:[%s2 + $0xf0] sm:$0xff] %v2201
  %2266 = vst [vmem:[%s2 + $0xf8] sm:$0xff] %v2202
  %2267 = vst [vmem:[%s2 + $0x100] sm:$0xff] %v2203
  %2268 = vst [vmem:[%s2 + $0x108] sm:$0xff] %v2204
  %2269 = vst [vmem:[%s2 + $0x110] sm:$0xff] %v2205
  %2270 = vst [vmem:[%s2 + $0x118] sm:$0xff] %v2206
  %2271 = vst [vmem:[%s2 + $0x120] sm:$0xff] %v2207
  %2272 = vst [vmem:[%s2 + $0x128] sm:$0xff] %v2208
  %2273 = vst [vmem:[%s2 + $0x130] sm:$0xff] %v2209
  %2274 = vst [vmem:[%s2 + $0x138] sm:$0xff] %v2210
  %2275 = vst [vmem:[%s2 + $0x140] sm:$0xff] %v2211
  %2276 = vst [vmem:[%s2 + $0x148] sm:$0xff] %v2212
  %2277 = vst [vmem:[%s2 + $0x150] sm:$0xff] %v2213
  %2278 = vst [vmem:[%s2 + $0x158] sm:$0xff] %v2214
  %2279 = vst [vmem:[%s2 + $0x160] sm:$0xff] %v2215
  %2280 = vst [vmem:[%s2 + $0x168] sm:$0xff] %v2216
  %2281 = vst [vmem:[%s2 + $0x170] sm:$0xff] %v2217
  %2282 = vst [vmem:[%s2 + $0x178] sm:$0xff] %v2218
  %2283 = vst [vmem:[%s2 + $0x180] sm:$0xff] %v2219
  %2284 = vst [vmem:[%s2 + $0x188] sm:$0xff] %v2220
  %2285 = vst [vmem:[%s2 + $0x190] sm:$0xff] %v2221
  %2286 = vst [vmem:[%s2 + $0x198] sm:$0xff] %v2222
  %2287 = vst [vmem:[%s2 + $0x1a0] sm:$0xff] %v2223
  %2288 = vst [vmem:[%s2 + $0x1a8] sm:$0xff] %v2224
  %2289 = vst [vmem:[%s2 + $0x1b0] sm:$0xff] %v2225
  %2290 = vst [vmem:[%s2 + $0x1b8] sm:$0xff] %v2226
  %2291 = vst [vmem:[%s2 + $0x1c0] sm:$0xff] %v2227
  %2292 = vst [vmem:[%s2 + $0x1c8] sm:$0xff] %v2228
  %2293 = vst [vmem:[%s2 + $0x1d0] sm:$0xff] %v2229
  %2294 = vst [vmem:[%s2 + $0x1d8] sm:$0xff] %v2230
  %2295 = vst [vmem:[%s2 + $0x1e0] sm:$0xff] %v2231
  %2296 = vst [vmem:[%s2 + $0x1e8] sm:$0xff] %v2232
  %2297 = vst [vmem:[%s2 + $0x1f0] sm:$0xff] %v2233
  %2298 = vst [vmem:[%s2 + $0x1f8] sm:$0xff] %v2234
  // Predicated region
  $region10: #{_lambda_.1} parent=0 // pred_check
    _
  $region11: #{_lambda_.1} parent=0 // pred_check_branch
    %2300 = sbr.rel (0) target = $region13
  $region12: #{_lambda_.1} parent=0 // pred_region
    _
  $region13: #{_lambda_.1} parent=0 // pred_fallthru
    _
  // Predicated region
  $region14: #{_lambda_.1} parent=0 // pred_check
    _
  $region15: #{_lambda_.1} parent=0 // pred_check_branch
    %2302 = sbr.rel (0) target = $region17
  $region16: #{_lambda_.1} parent=0 // pred_region
    _
  $region17: #{_lambda_.1} parent=0 // pred_fallthru
    _

</llo_original>
